<compile_context>
chip_gen: v6e
topology: v6e:2x2x1
jax: 0.10.0
libtpu: 0.0.40
codegen_flags: <defaults>
</compile_context>

<pallas_src>
import functools

import jax
import jax.numpy as jnp
from jax.experimental import pallas as pl
from jax.experimental.pallas import tpu as pltpu


# ---------------------------------------------------------------------------
# shared GRU gate math (f32, VPU)
# ---------------------------------------------------------------------------
def _gru_gates(gx, gh, h, b_rz, b_in, b_hn, H):
    # PyTorch nn.GRU cell (r/z input+hidden biases pre-summed in prepare_params):
    #   r = sigmoid(gx_r + gh_r + b_rz[:, :H]) ; z = sigmoid(gx_z + gh_z + b_rz[:, H:])
    #   n = tanh(gx_n + b_in + r * (gh_n + b_hn)) ; h' = (1 - z) * n + z * h
    rz = jax.nn.sigmoid(gx[:, :2 * H] + gh[:, :2 * H] + b_rz)
    r = rz[:, :H]
    z = rz[:, H:]
    n = jnp.tanh(gx[:, 2 * H:] + b_in + r * (gh[:, 2 * H:] + b_hn))
    return (1.0 - z) * n + z * h


def _vmem_limit_bytes(*arrays):
    # Actual padded residency here is well under 1 MiB; 8 MiB floor leaves generous
    # headroom for (8,128) tile padding + double buffering and stays far below the
    # v7x 64 MiB physical / 32 MiB default-scoped ceiling.
    total = sum(int(x.size) * x.dtype.itemsize for x in arrays)
    return max(8 * 1024 * 1024, 4 * total)


# ---------------------------------------------------------------------------
# Encoder: 2-layer GRU over the whole sequence in ONE kernel invocation.
# Layer-major: gx for all timesteps is one batched matmul per layer; the serial
# loop carries only gh + gates.  All S outputs stored with a single write.
# ---------------------------------------------------------------------------
def _encoder_kernel(emb_ref,
                    wih0_ref, whh0_ref, brz0_ref, bin0_ref, bhn0_ref,
                    wih1_ref, whh1_ref, brz1_ref, bin1_ref, bhn1_ref,
                    out_ref, hid_ref, *, seq_len, batch, hidden_size):
    S, B, H = seq_len, batch, hidden_size
    cdt = wih0_ref.dtype                       # matmul compute dtype (bf16)

    emb = emb_ref[...]                         # (S*B, H), already in cdt
    whh0 = whh0_ref[...]
    whh1 = whh1_ref[...]
    brz0, bin0, bhn0 = brz0_ref[...], bin0_ref[...], bhn0_ref[...]
    brz1, bin1, bhn1 = brz1_ref[...], bin1_ref[...], bhn1_ref[...]

    # Input-to-hidden matmul batched over the full sequence (one MXU push per layer
    # instead of S tiny (B,H)x(H,3H) pushes).
    gx0_all = jnp.dot(emb, wih0_ref[...], preferred_element_type=jnp.float32)   # (S*B,3H)

    h0 = jnp.zeros((B, H), jnp.float32)
    h0_seq = []
    # Static unroll: S is small/static here.  For large S switch to lax.fori_loop or a
    # grid axis with the hidden carried in VMEM scratch to bound live ranges.
    for t in range(S):
        gh0 = jnp.dot(h0.astype(cdt), whh0, preferred_element_type=jnp.float32)
        h0 = _gru_gates(gx0_all[t * B:(t + 1) * B], gh0, h0, brz0, bin0, bhn0, H)
        h0_seq.append(h0)

    # Layer 1 batches its input-to-hidden matmul over the full layer-0 output sequence.
    h0_all = jnp.concatenate(h0_seq, axis=0)                                    # (S*B, H)
    gx1_all = jnp.dot(h0_all.astype(cdt), wih1_ref[...],
                      preferred_element_type=jnp.float32)

    h1 = jnp.zeros((B, H), jnp.float32)
    h1_seq = []
    for t in range(S):
        gh1 = jnp.dot(h1.astype(cdt), whh1, preferred_element_type=jnp.float32)
        h1 = _gru_gates(gx1_all[t * B:(t + 1) * B], gh1, h1, brz1, bin1, bhn1, H)
        h1_seq.append(h1)

    out_ref[...] = jnp.stack(h1_seq, axis=0)          # (S, B, H) single store
    hid_ref[...] = jnp.stack([h0, h1], axis=0)        # (2, B, H)


def encoder_forward(params, word_inputs):
    """word_inputs: (seq_len, batch) int32 -> (enc_outputs (S,B,H), enc_hidden (2,B,H))."""
    seq_len, batch = word_inputs.shape
    H = params["hidden_size"]

    # One embedding gather for the whole sequence (XLA side), flattened so the kernel's
    # batched gx matmul needs no in-kernel reshape.  Row t*B + b == (t, b).
    emb2 = params["enc_embedding"][word_inputs].reshape(seq_len * batch, H)

    e0, e1 = params["enc0"], params["enc1"]
    operands = (emb2,
                e0["wih_t"], e0["whh_t"], e0["b_rz"], e0["b_in"], e0["b_hn"],
                e1["wih_t"], e1["whh_t"], e1["b_rz"], e1["b_in"], e1["b_hn"])

    vmem = pl.BlockSpec(memory_space=pltpu.MemorySpace.VMEM)
    kernel = functools.partial(_encoder_kernel, seq_len=seq_len, batch=batch,
                               hidden_size=H)

    enc_out, enc_hid = pl.pallas_call(
        kernel,
        in_specs=[vmem] * len(operands),
        out_specs=(vmem, vmem),
        out_shape=(
            jax.ShapeDtypeStruct((seq_len, batch, H), jnp.float32),
            jax.ShapeDtypeStruct((2, batch, H), jnp.float32),
        ),
        compiler_params=pltpu.CompilerParams(
            vmem_limit_bytes=_vmem_limit_bytes(*operands)),
    )(*operands)
    return enc_out, enc_hid


# ---------------------------------------------------------------------------
# Decoder: ONE pallas_call for the whole (teacher-forced) decode loop.
# grid=(T,); hidden/context carried in the VMEM-resident output blocks.
# ---------------------------------------------------------------------------
def _attn_decoder_step_kernel(
        tok_ref,                                            # SMEM (T, B) int32 (prefetched)
        emb_ref, enc_ref, inith_ref, initc_ref,
        wih0a_ref, wih0b_ref, whh0_ref, brz0_ref, bin0_ref, bhn0_ref,
        wih1_ref, whh1_ref, brz1_ref, bin1_ref, bhn1_ref,
        outwh_ref, outwc_ref, outb_ref,
        logp_ref, attn_ref, hid_ref, ctx_ref,
        *, batch, hidden_size):
    B, H = batch, hidden_size
    t = pl.program_id(0)
    cdt = whh0_ref.dtype                                    # matmul compute dtype (bf16)

    # hid_ref / ctx_ref have constant block indices -> VMEM-resident across the whole
    # decode grid; they double as the step-to-step carry.  Seed them at step 0.
    @pl.when(t == 0)
    def _():
        hid_ref[...] = inith_ref[...]
        ctx_ref[...] = initc_ref[...]

    # In-kernel token embedding gather: ids live in SMEM (scalar prefetch), the (V,1,H)
    # table is VMEM-resident, one dynamic leading-axis row load per batch element.
    rows = [emb_ref[tok_ref[t, b]] for b in range(B)]       # each (1, H) in cdt
    wemb = rows[0] if B == 1 else jnp.concatenate(rows, axis=0)   # (B, H)

    ctx_prev = ctx_ref[...]
    h_prev0 = hid_ref[0]
    h_prev1 = hid_ref[1]

    # rnn_input = cat(word_embedded, last_context): split W_ih_l0 -> two accumulated dots.
    # (At H=32 both halves pad to the same MXU K-tile; the split avoids an in-kernel
    # lane concat.  A single (B,2H)x(2H,3H) dot becomes preferable at larger H.)
    gx0 = (jnp.dot(wemb, wih0a_ref[...], preferred_element_type=jnp.float32)
           + jnp.dot(ctx_prev.astype(cdt), wih0b_ref[...],
                     preferred_element_type=jnp.float32))
    gh0 = jnp.dot(h_prev0.astype(cdt), whh0_ref[...], preferred_element_type=jnp.float32)
    h0 = _gru_gates(gx0, gh0, h_prev0, brz0_ref[...], bin0_ref[...], bhn0_ref[...], H)

    # TODO(synk): nn.GRU inter-layer dropout (p=0.05) is a train-only op; eval semantics.
    gx1 = jnp.dot(h0.astype(cdt), wih1_ref[...], preferred_element_type=jnp.float32)
    gh1 = jnp.dot(h_prev1.astype(cdt), whh1_ref[...], preferred_element_type=jnp.float32)
    h1 = _gru_gates(gx1, gh1, h_prev1, brz1_ref[...], bin1_ref[...], bhn1_ref[...], H)

    hid_ref[...] = jnp.stack([h0, h1], axis=0)

    # Attn('general').score(): per-batch dot(hidden, enc_out[s]).  (The reference code
    # computes-then-discards the self.attn Linear output, so it is omitted.)  Softmax
    # over the sequence axis, exact divide.  At real S*H sizes this should move to a
    # batched dot_general on the MXU.
    enc = enc_ref[...]                                      # (B, S, H) f32, resident
    energies = jnp.sum(enc * h1[:, None, :], axis=-1)       # (B, S)
    energies = energies - jnp.max(energies, axis=-1, keepdims=True)
    e = jnp.exp(energies)
    attn = e / jnp.sum(e, axis=-1, keepdims=True)
    attn_ref[0] = attn                                      # (B, S), lane-dense

    # context = attn.bmm(encoder_outputs.transpose(0,1)) -> (B, H)
    context = jnp.sum(attn[:, :, None] * enc, axis=1)
    ctx_ref[...] = context

    # out(cat(rnn_output, context)) + log_softmax.  Vocab axis is padded to a multiple of
    # 128 (lane-dense store); padded bias = -1e9 keeps log_softmax exact on real columns.
    logits = (jnp.dot(h1.astype(cdt), outwh_ref[...], preferred_element_type=jnp.float32)
              + jnp.dot(context.astype(cdt), outwc_ref[...],
                        preferred_element_type=jnp.float32)
              + outb_ref[...])
    logits = logits - jnp.max(logits, axis=-1, keepdims=True)
    logp_ref[0] = logits - jnp.log(jnp.sum(jnp.exp(logits), axis=-1, keepdims=True))


def decode_steps(params, tokens, init_context, init_hidden, encoder_outputs):
    """Run a whole teacher-forced decode loop in ONE pallas_call.

    tokens          : (T, B) int32 — one token row per decode step
    init_context    : (B, H) or None (zeros, as in the module)
    init_hidden     : (2, B, H)
    encoder_outputs : (S, B, H)   (module layout)
    returns: log_probs (T,B,V), attn (T,B,S), final_hidden (2,B,H), final_context (B,H)
    """
    T, B = tokens.shape
    S, _, H = encoder_outputs.shape
    V = params["output_size"]
    Vp = params["padded_output_size"]

    if init_context is None:
        init_context = jnp.zeros((B, H), jnp.float32)

    # Loop-invariant layout swap, once per decode CALL (not per step).
    enc_bsh = jnp.swapaxes(encoder_outputs, 0, 1)           # (B, S, H)

    d0, d1 = params["dec0"], params["dec1"]
    operands = (params["dec_embedding"], enc_bsh,
                init_hidden.astype(jnp.float32), init_context.astype(jnp.float32),
                d0["wih_a"], d0["wih_b"], d0["whh_t"], d0["b_rz"], d0["b_in"], d0["b_hn"],
                d1["wih_t"], d1["whh_t"], d1["b_rz"], d1["b_in"], d1["b_hn"],
                params["out_w_h"], params["out_w_c"], params["out_b"])

    def _resident(x):
        nd = x.ndim
        return pl.BlockSpec(x.shape, lambda t, tok, _nd=nd: (0,) * _nd)

    grid_spec = pltpu.PrefetchScalarGridSpec(
        num_scalar_prefetch=1,                              # token ids -> SMEM
        grid=(T,),
        in_specs=[_resident(x) for x in operands],
        out_specs=[
            pl.BlockSpec((1, B, Vp), lambda t, tok: (t, 0, 0)),   # per-step log-probs
            pl.BlockSpec((1, B, S), lambda t, tok: (t, 0, 0)),    # per-step attention
            pl.BlockSpec((2, B, H), lambda t, tok: (0, 0, 0)),    # resident carry: hidden
            pl.BlockSpec((B, H), lambda t, tok: (0, 0)),          # resident carry: context
        ],
    )

    kernel = functools.partial(_attn_decoder_step_kernel, batch=B, hidden_size=H)
    logp, attn, hid, ctx = pl.pallas_call(
        kernel,
        grid_spec=grid_spec,
        out_shape=(
            jax.ShapeDtypeStruct((T, B, Vp), jnp.float32),
            jax.ShapeDtypeStruct((T, B, S), jnp.float32),
            jax.ShapeDtypeStruct((2, B, H), jnp.float32),
            jax.ShapeDtypeStruct((B, H), jnp.float32),
        ),
        compiler_params=pltpu.CompilerParams(
            dimension_semantics=("arbitrary",),             # sequential recurrence
            vmem_limit_bytes=_vmem_limit_bytes(*operands)),
    )(tokens.astype(jnp.int32), *operands)

    return logp[:, :, :V], attn, hid, ctx


def decoder_forward(params, word_input, last_context, last_hidden, encoder_outputs):
    """Single decode step (module-parity API).  word_input: (1, batch) int32."""
    logp, attn, hid, ctx = decode_steps(params, word_input, last_context, last_hidden,
                                        encoder_outputs)
    # (output, context, hidden, attn_weights) with attn shaped (B, 1, S) like the module.
    return logp[0], ctx, hid, attn[0][:, None, :]


# ---------------------------------------------------------------------------
# SEQ2SEQ dispatch (mirrors the PyTorch forward(cmd, *inputs))
# ---------------------------------------------------------------------------
def seq2seq_forward(params, cmd, *inputs):
    if cmd == "encoding":
        return encoder_forward(params, *inputs)
    elif cmd == "decoding":
        return decoder_forward(params, *inputs)
    raise NotImplementedError


# ---------------------------------------------------------------------------
# deterministic parameter init (shapes follow the nn.Module __init__)
# ---------------------------------------------------------------------------
def init_params(key, input_size, output_size, hidden_size):
    H = hidden_size
    keys = iter(jax.random.split(key, 32))
    u = lambda shp, bound: jax.random.uniform(next(keys), shp, jnp.float32, -bound, bound)
    kH = 1.0 / (H ** 0.5)

    return {
        "hidden_size": H,
        "output_size": output_size,
        # EncoderRNN
        "enc_embedding": jax.random.normal(next(keys), (input_size, H), jnp.float32),
        "enc_w_ih0": u((3 * H, H), kH), "enc_w_hh0": u((3 * H, H), kH),
        "enc_b_ih0": u((3 * H,), kH),   "enc_b_hh0": u((3 * H,), kH),
        "enc_w_ih1": u((3 * H, H), kH), "enc_w_hh1": u((3 * H, H), kH),
        "enc_b_ih1": u((3 * H,), kH),   "enc_b_hh1": u((3 * H,), kH),
        # AttnDecoderRNN
        "dec_embedding": jax.random.normal(next(keys), (output_size, H), jnp.float32),
        "dec_w_ih0": u((3 * H, 2 * H), kH), "dec_w_hh0": u((3 * H, H), kH),
        "dec_b_ih0": u((3 * H,), kH),       "dec_b_hh0": u((3 * H,), kH),
        "dec_w_ih1": u((3 * H, H), kH),     "dec_w_hh1": u((3 * H, H), kH),
        "dec_b_ih1": u((3 * H,), kH),       "dec_b_hh1": u((3 * H,), kH),
        "dec_out_w": u((output_size, 2 * H), 1.0 / ((2 * H) ** 0.5)),
        "dec_out_b": u((output_size,), 1.0 / ((2 * H) ** 0.5)),
        # NOTE: decoder.attn.attn Linear exists in the module but its output is discarded
        # in Attn.score('general'); it contributes nothing to the forward pass.
    }


def prepare_params(raw, matmul_dtype=jnp.bfloat16):
    """One-time weight packing: transposes, pre-summed r/z biases, split concat-weights,
    bf16 matmul operands, lane-dense (padded) output projection."""
    H = raw["hidden_size"]
    V = raw["output_size"]
    Vp = ((V + 127) // 128) * 128

    def pack_gru(w_ih, w_hh, b_ih, b_hh):
        return {
            "wih_t": w_ih.T.astype(matmul_dtype),                    # (in, 3H)
            "whh_t": w_hh.T.astype(matmul_dtype),                    # (H, 3H)
            "b_rz": (b_ih[:2 * H] + b_hh[:2 * H]).reshape(1, 2 * H).astype(jnp.float32),
            "b_in": b_ih[2 * H:].reshape(1, H).astype(jnp.float32),
            "b_hn": b_hh[2 * H:].reshape(1, H).astype(jnp.float32),
        }

    enc0 = pack_gru(raw["enc_w_ih0"], raw["enc_w_hh0"], raw["enc_b_ih0"], raw["enc_b_hh0"])
    enc1 = pack_gru(raw["enc_w_ih1"], raw["enc_w_hh1"], raw["enc_b_ih1"], raw["enc_b_hh1"])
    dec0 = pack_gru(raw["dec_w_ih0"], raw["dec_w_hh0"], raw["dec_b_ih0"], raw["dec_b_hh0"])
    dec1 = pack_gru(raw["dec_w_ih1"], raw["dec_w_hh1"], raw["dec_b_ih1"], raw["dec_b_hh1"])
    # decoder layer-0 consumes cat(wemb, ctx): split the (2H, 3H) input weight.
    dec0["wih_a"] = dec0["wih_t"][:H]                                # wemb half
    dec0["wih_b"] = dec0["wih_t"][H:]                                # ctx half

    # Output projection: vocab (lane) axis padded to a multiple of 128; padded bias is
    # -1e9 so exp() of padded logits is exactly 0 and log_softmax on real columns is exact.
    out_w_t = jnp.pad(raw["dec_out_w"].T, ((0, 0), (0, Vp - V))).astype(matmul_dtype)
    out_b = jnp.full((1, Vp), -1e9, jnp.float32).at[0, :V].set(raw["dec_out_b"])

    return {
        "hidden_size": H,
        "output_size": V,
        "padded_output_size": Vp,
        "enc_embedding": raw["enc_embedding"].astype(matmul_dtype),              # (I, H)
        # (V, 1, H): leading axis dynamically indexed in-kernel (per-token row gather)
        "dec_embedding": raw["dec_embedding"].astype(matmul_dtype)[:, None, :],
        "enc0": enc0, "enc1": enc1, "dec0": dec0, "dec1": dec1,
        "out_w_h": out_w_t[:H],                                      # rnn_output half
        "out_w_c": out_w_t[H:],                                      # context half
        "out_b": out_b,
    }


if __name__ == "__main__":
    input_size, output_size, hidden_size = 20, 20, 32
    seq_len, batch = 8, 2

    key = jax.random.PRNGKey(0)
    k_params, k_src, k_tgt, k_seq = jax.random.split(key, 4)
    params = prepare_params(init_params(k_params, input_size, output_size, hidden_size))

    word_inputs = jax.random.randint(k_src, (seq_len, batch), 0, input_size)     # (S, B)
    decoder_input = jax.random.randint(k_tgt, (1, batch), 0, output_size)        # (1, B)

    # cmd == 'encoding'
    enc_outputs, enc_hidden = seq2seq_forward(params, "encoding", word_inputs)
    jax.block_until_ready((enc_outputs, enc_hidden))
    assert enc_outputs.shape == (seq_len, batch, hidden_size)
    assert enc_hidden.shape == (2, batch, hidden_size)

    # cmd == 'decoding' (single step, module-parity API; decoder_context=None -> zeros)
    dec_out, dec_ctx, dec_hid, dec_attn = seq2seq_forward(
        params, "decoding", decoder_input, None, enc_hidden, enc_outputs)
    jax.block_until_ready((dec_out, dec_ctx, dec_hid, dec_attn))
    assert dec_out.shape == (batch, output_size)
    assert dec_ctx.shape == (batch, hidden_size)
    assert dec_hid.shape == (2, batch, hidden_size)
    assert dec_attn.shape == (batch, 1, seq_len)

    # Fused multi-step decode: the whole teacher-forced loop is ONE pallas_call.
    n_steps = 5
    tgt_tokens = jax.random.randint(k_seq, (n_steps, batch), 0, output_size)
    tgt_tokens = tgt_tokens.at[0].set(decoder_input[0])
    logps, attns, hid_T, ctx_T = decode_steps(params, tgt_tokens, None,
                                              enc_hidden, enc_outputs)
    jax.block_until_ready((logps, attns, hid_T, ctx_T))
    assert logps.shape == (n_steps, batch, output_size)
    assert attns.shape == (n_steps, batch, seq_len)
    assert hid_T.shape == (2, batch, hidden_size)
    assert ctx_T.shape == (batch, hidden_size)
    # step 0 of the fused loop must agree with the single-step module path
    assert jnp.allclose(logps[0], dec_out, atol=1e-3, rtol=1e-3)

    print("KERNEL_OK")
</pallas_src>

<mosaic_0001>
module attributes {stable_mosaic.version = 11 : i64} {
  func.func @_encoder_kernel(%arg0: memref<16x32xbf16, #tpu.memory_space<vmem>>, %arg1: memref<32x96xbf16, #tpu.memory_space<vmem>>, %arg2: memref<32x96xbf16, #tpu.memory_space<vmem>>, %arg3: memref<1x64xf32, #tpu.memory_space<vmem>>, %arg4: memref<1x32xf32, #tpu.memory_space<vmem>>, %arg5: memref<1x32xf32, #tpu.memory_space<vmem>>, %arg6: memref<32x96xbf16, #tpu.memory_space<vmem>>, %arg7: memref<32x96xbf16, #tpu.memory_space<vmem>>, %arg8: memref<1x64xf32, #tpu.memory_space<vmem>>, %arg9: memref<1x32xf32, #tpu.memory_space<vmem>>, %arg10: memref<1x32xf32, #tpu.memory_space<vmem>>, %arg11: memref<8x2x32xf32, #tpu.memory_space<vmem>>, %arg12: memref<2x2x32xf32, #tpu.memory_space<vmem>>) attributes {dimension_semantics = [], scalar_prefetch = 0 : i64, scratch_operands = 0 : i64, tpu.core_type = #tpu.core_type<tc>} {
    %c0 = arith.constant 0 : index
    %c0_0 = arith.constant 0 : index
    %0 = vector.load %arg0[%c0, %c0_0] : memref<16x32xbf16, #tpu.memory_space<vmem>>, vector<16x32xbf16>
    %c0_1 = arith.constant 0 : index
    %c0_2 = arith.constant 0 : index
    %1 = vector.load %arg2[%c0_1, %c0_2] : memref<32x96xbf16, #tpu.memory_space<vmem>>, vector<32x96xbf16>
    %c0_3 = arith.constant 0 : index
    %c0_4 = arith.constant 0 : index
    %2 = vector.load %arg7[%c0_3, %c0_4] : memref<32x96xbf16, #tpu.memory_space<vmem>>, vector<32x96xbf16>
    %c0_5 = arith.constant 0 : index
    %c0_6 = arith.constant 0 : index
    %3 = vector.load %arg3[%c0_5, %c0_6] : memref<1x64xf32, #tpu.memory_space<vmem>>, vector<1x64xf32>
    %c0_7 = arith.constant 0 : index
    %c0_8 = arith.constant 0 : index
    %4 = vector.load %arg4[%c0_7, %c0_8] : memref<1x32xf32, #tpu.memory_space<vmem>>, vector<1x32xf32>
    %c0_9 = arith.constant 0 : index
    %c0_10 = arith.constant 0 : index
    %5 = vector.load %arg5[%c0_9, %c0_10] : memref<1x32xf32, #tpu.memory_space<vmem>>, vector<1x32xf32>
    %c0_11 = arith.constant 0 : index
    %c0_12 = arith.constant 0 : index
    %6 = vector.load %arg8[%c0_11, %c0_12] : memref<1x64xf32, #tpu.memory_space<vmem>>, vector<1x64xf32>
    %c0_13 = arith.constant 0 : index
    %c0_14 = arith.constant 0 : index
    %7 = vector.load %arg9[%c0_13, %c0_14] : memref<1x32xf32, #tpu.memory_space<vmem>>, vector<1x32xf32>
    %c0_15 = arith.constant 0 : index
    %c0_16 = arith.constant 0 : index
    %8 = vector.load %arg10[%c0_15, %c0_16] : memref<1x32xf32, #tpu.memory_space<vmem>>, vector<1x32xf32>
    %c0_17 = arith.constant 0 : index
    %c0_18 = arith.constant 0 : index
    %9 = vector.load %arg1[%c0_17, %c0_18] : memref<32x96xbf16, #tpu.memory_space<vmem>>, vector<32x96xbf16>
    %cst = arith.constant dense<0.000000e+00> : vector<16x96xf32>
    %10 = tpu.matmul %0, %9, %cst {dimension_numbers = #tpu.dot_dimension_numbers<[1], [0], [0], [1], [0, 0, 1, 1], [], []>} : vector<16x32xbf16>, vector<32x96xbf16>, vector<16x96xf32> -> vector<16x96xf32>
    %cst_19 = arith.constant 0.000000e+00 : f32
    %11 = vector.broadcast %cst_19 : f32 to vector<2x32xf32>
    %12 = arith.truncf %11 : vector<2x32xf32> to vector<2x32xbf16>
    %cst_20 = arith.constant dense<0.000000e+00> : vector<2x96xf32>
    %13 = tpu.matmul %12, %1, %cst_20 {dimension_numbers = #tpu.dot_dimension_numbers<[1], [0], [0], [1], [0, 0, 1, 1], [], []>} : vector<2x32xbf16>, vector<32x96xbf16>, vector<2x96xf32> -> vector<2x96xf32>
    %14 = vector.extract_strided_slice %10 {offsets = [0, 0], sizes = [2, 96], strides = [1, 1]} : vector<16x96xf32> to vector<2x96xf32>
    %15 = vector.extract_strided_slice %14 {offsets = [0, 0], sizes = [2, 64], strides = [1, 1]} : vector<2x96xf32> to vector<2x64xf32>
    %16 = vector.extract_strided_slice %13 {offsets = [0, 0], sizes = [2, 64], strides = [1, 1]} : vector<2x96xf32> to vector<2x64xf32>
    %17 = arith.addf %15, %16 : vector<2x64xf32>
    %18 = vector.broadcast %3 : vector<1x64xf32> to vector<2x64xf32>
    %19 = arith.addf %17, %18 : vector<2x64xf32>
    %20 = arith.negf %19 : vector<2x64xf32>
    %21 = math.exp %20 : vector<2x64xf32>
    %cst_21 = arith.constant 1.000000e+00 : f32
    %22 = vector.broadcast %cst_21 : f32 to vector<2x64xf32>
    %23 = arith.addf %22, %21 : vector<2x64xf32>
    %24 = arith.divf %22, %23 : vector<2x64xf32>
    %25 = vector.extract_strided_slice %24 {offsets = [0, 0], sizes = [2, 32], strides = [1, 1]} : vector<2x64xf32> to vector<2x32xf32>
    %26 = vector.extract_strided_slice %24 {offsets = [0, 32], sizes = [2, 32], strides = [1, 1]} : vector<2x64xf32> to vector<2x32xf32>
    %27 = vector.extract_strided_slice %14 {offsets = [0, 64], sizes = [2, 32], strides = [1, 1]} : vector<2x96xf32> to vector<2x32xf32>
    %28 = vector.broadcast %4 : vector<1x32xf32> to vector<2x32xf32>
    %29 = arith.addf %27, %28 : vector<2x32xf32>
    %30 = vector.extract_strided_slice %13 {offsets = [0, 64], sizes = [2, 32], strides = [1, 1]} : vector<2x96xf32> to vector<2x32xf32>
    %31 = vector.broadcast %5 : vector<1x32xf32> to vector<2x32xf32>
    %32 = arith.addf %30, %31 : vector<2x32xf32>
    %33 = arith.mulf %25, %32 : vector<2x32xf32>
    %34 = arith.addf %29, %33 : vector<2x32xf32>
    %35 = math.tanh %34 : vector<2x32xf32>
    %cst_22 = arith.constant 1.000000e+00 : f32
    %36 = vector.broadcast %cst_22 : f32 to vector<2x32xf32>
    %37 = arith.subf %36, %26 : vector<2x32xf32>
    %38 = arith.mulf %37, %35 : vector<2x32xf32>
    %39 = arith.mulf %26, %11 : vector<2x32xf32>
    %40 = arith.addf %38, %39 : vector<2x32xf32>
    %41 = arith.truncf %40 : vector<2x32xf32> to vector<2x32xbf16>
    %cst_23 = arith.constant dense<0.000000e+00> : vector<2x96xf32>
    %42 = tpu.matmul %41, %1, %cst_23 {dimension_numbers = #tpu.dot_dimension_numbers<[1], [0], [0], [1], [0, 0, 1, 1], [], []>} : vector<2x32xbf16>, vector<32x96xbf16>, vector<2x96xf32> -> vector<2x96xf32>
    %43 = vector.extract_strided_slice %10 {offsets = [2, 0], sizes = [2, 96], strides = [1, 1]} : vector<16x96xf32> to vector<2x96xf32>
    %44 = vector.extract_strided_slice %43 {offsets = [0, 0], sizes = [2, 64], strides = [1, 1]} : vector<2x96xf32> to vector<2x64xf32>
    %45 = vector.extract_strided_slice %42 {offsets = [0, 0], sizes = [2, 64], strides = [1, 1]} : vector<2x96xf32> to vector<2x64xf32>
    %46 = arith.addf %44, %45 : vector<2x64xf32>
    %47 = vector.broadcast %3 : vector<1x64xf32> to vector<2x64xf32>
    %48 = arith.addf %46, %47 : vector<2x64xf32>
    %49 = arith.negf %48 : vector<2x64xf32>
    %50 = math.exp %49 : vector<2x64xf32>
    %cst_24 = arith.constant 1.000000e+00 : f32
    %51 = vector.broadcast %cst_24 : f32 to vector<2x64xf32>
    %52 = arith.addf %51, %50 : vector<2x64xf32>
    %53 = arith.divf %51, %52 : vector<2x64xf32>
    %54 = vector.extract_strided_slice %53 {offsets = [0, 0], sizes = [2, 32], strides = [1, 1]} : vector<2x64xf32> to vector<2x32xf32>
    %55 = vector.extract_strided_slice %53 {offsets = [0, 32], sizes = [2, 32], strides = [1, 1]} : vector<2x64xf32> to vector<2x32xf32>
    %56 = vector.extract_strided_slice %43 {offsets = [0, 64], sizes = [2, 32], strides = [1, 1]} : vector<2x96xf32> to vector<2x32xf32>
    %57 = vector.broadcast %4 : vector<1x32xf32> to vector<2x32xf32>
    %58 = arith.addf %56, %57 : vector<2x32xf32>
    %59 = vector.extract_strided_slice %42 {offsets = [0, 64], sizes = [2, 32], strides = [1, 1]} : vector<2x96xf32> to vector<2x32xf32>
    %60 = vector.broadcast %5 : vector<1x32xf32> to vector<2x32xf32>
    %61 = arith.addf %59, %60 : vector<2x32xf32>
    %62 = arith.mulf %54, %61 : vector<2x32xf32>
    %63 = arith.addf %58, %62 : vector<2x32xf32>
    %64 = math.tanh %63 : vector<2x32xf32>
    %cst_25 = arith.constant 1.000000e+00 : f32
    %65 = vector.broadcast %cst_25 : f32 to vector<2x32xf32>
    %66 = arith.subf %65, %55 : vector<2x32xf32>
    %67 = arith.mulf %66, %64 : vector<2x32xf32>
    %68 = arith.mulf %55, %40 : vector<2x32xf32>
    %69 = arith.addf %67, %68 : vector<2x32xf32>
    %70 = arith.truncf %69 : vector<2x32xf32> to vector<2x32xbf16>
    %cst_26 = arith.constant dense<0.000000e+00> : vector<2x96xf32>
    %71 = tpu.matmul %70, %1, %cst_26 {dimension_numbers = #tpu.dot_dimension_numbers<[1], [0], [0], [1], [0, 0, 1, 1], [], []>} : vector<2x32xbf16>, vector<32x96xbf16>, vector<2x96xf32> -> vector<2x96xf32>
    %72 = vector.extract_strided_slice %10 {offsets = [4, 0], sizes = [2, 96], strides = [1, 1]} : vector<16x96xf32> to vector<2x96xf32>
    %73 = vector.extract_strided_slice %72 {offsets = [0, 0], sizes = [2, 64], strides = [1, 1]} : vector<2x96xf32> to vector<2x64xf32>
    %74 = vector.extract_strided_slice %71 {offsets = [0, 0], sizes = [2, 64], strides = [1, 1]} : vector<2x96xf32> to vector<2x64xf32>
    %75 = arith.addf %73, %74 : vector<2x64xf32>
    %76 = vector.broadcast %3 : vector<1x64xf32> to vector<2x64xf32>
    %77 = arith.addf %75, %76 : vector<2x64xf32>
    %78 = arith.negf %77 : vector<2x64xf32>
    %79 = math.exp %78 : vector<2x64xf32>
    %cst_27 = arith.constant 1.000000e+00 : f32
    %80 = vector.broadcast %cst_27 : f32 to vector<2x64xf32>
    %81 = arith.addf %80, %79 : vector<2x64xf32>
    %82 = arith.divf %80, %81 : vector<2x64xf32>
    %83 = vector.extract_strided_slice %82 {offsets = [0, 0], sizes = [2, 32], strides = [1, 1]} : vector<2x64xf32> to vector<2x32xf32>
    %84 = vector.extract_strided_slice %82 {offsets = [0, 32], sizes = [2, 32], strides = [1, 1]} : vector<2x64xf32> to vector<2x32xf32>
    %85 = vector.extract_strided_slice %72 {offsets = [0, 64], sizes = [2, 32], strides = [1, 1]} : vector<2x96xf32> to vector<2x32xf32>
    %86 = vector.broadcast %4 : vector<1x32xf32> to vector<2x32xf32>
    %87 = arith.addf %85, %86 : vector<2x32xf32>
    %88 = vector.extract_strided_slice %71 {offsets = [0, 64], sizes = [2, 32], strides = [1, 1]} : vector<2x96xf32> to vector<2x32xf32>
    %89 = vector.broadcast %5 : vector<1x32xf32> to vector<2x32xf32>
    %90 = arith.addf %88, %89 : vector<2x32xf32>
    %91 = arith.mulf %83, %90 : vector<2x32xf32>
    %92 = arith.addf %87, %91 : vector<2x32xf32>
    %93 = math.tanh %92 : vector<2x32xf32>
    %cst_28 = arith.constant 1.000000e+00 : f32
    %94 = vector.broadcast %cst_28 : f32 to vector<2x32xf32>
    %95 = arith.subf %94, %84 : vector<2x32xf32>
    %96 = arith.mulf %95, %93 : vector<2x32xf32>
    %97 = arith.mulf %84, %69 : vector<2x32xf32>
    %98 = arith.addf %96, %97 : vector<2x32xf32>
    %99 = arith.truncf %98 : vector<2x32xf32> to vector<2x32xbf16>
    %cst_29 = arith.constant dense<0.000000e+00> : vector<2x96xf32>
    %100 = tpu.matmul %99, %1, %cst_29 {dimension_numbers = #tpu.dot_dimension_numbers<[1], [0], [0], [1], [0, 0, 1, 1], [], []>} : vector<2x32xbf16>, vector<32x96xbf16>, vector<2x96xf32> -> vector<2x96xf32>
    %101 = vector.extract_strided_slice %10 {offsets = [6, 0], sizes = [2, 96], strides = [1, 1]} : vector<16x96xf32> to vector<2x96xf32>
    %102 = vector.extract_strided_slice %101 {offsets = [0, 0], sizes = [2, 64], strides = [1, 1]} : vector<2x96xf32> to vector<2x64xf32>
    %103 = vector.extract_strided_slice %100 {offsets = [0, 0], sizes = [2, 64], strides = [1, 1]} : vector<2x96xf32> to vector<2x64xf32>
    %104 = arith.addf %102, %103 : vector<2x64xf32>
    %105 = vector.broadcast %3 : vector<1x64xf32> to vector<2x64xf32>
    %106 = arith.addf %104, %105 : vector<2x64xf32>
    %107 = arith.negf %106 : vector<2x64xf32>
    %108 = math.exp %107 : vector<2x64xf32>
    %cst_30 = arith.constant 1.000000e+00 : f32
    %109 = vector.broadcast %cst_30 : f32 to vector<2x64xf32>
    %110 = arith.addf %109, %108 : vector<2x64xf32>
    %111 = arith.divf %109, %110 : vector<2x64xf32>
    %112 = vector.extract_strided_slice %111 {offsets = [0, 0], sizes = [2, 32], strides = [1, 1]} : vector<2x64xf32> to vector<2x32xf32>
    %113 = vector.extract_strided_slice %111 {offsets = [0, 32], sizes = [2, 32], strides = [1, 1]} : vector<2x64xf32> to vector<2x32xf32>
    %114 = vector.extract_strided_slice %101 {offsets = [0, 64], sizes = [2, 32], strides = [1, 1]} : vector<2x96xf32> to vector<2x32xf32>
    %115 = vector.broadcast %4 : vector<1x32xf32> to vector<2x32xf32>
    %116 = arith.addf %114, %115 : vector<2x32xf32>
    %117 = vector.extract_strided_slice %100 {offsets = [0, 64], sizes = [2, 32], strides = [1, 1]} : vector<2x96xf32> to vector<2x32xf32>
    %118 = vector.broadcast %5 : vector<1x32xf32> to vector<2x32xf32>
    %119 = arith.addf %117, %118 : vector<2x32xf32>
    %120 = arith.mulf %112, %119 : vector<2x32xf32>
    %121 = arith.addf %116, %120 : vector<2x32xf32>
    %122 = math.tanh %121 : vector<2x32xf32>
    %cst_31 = arith.constant 1.000000e+00 : f32
    %123 = vector.broadcast %cst_31 : f32 to vector<2x32xf32>
    %124 = arith.subf %123, %113 : vector<2x32xf32>
    %125 = arith.mulf %124, %122 : vector<2x32xf32>
    %126 = arith.mulf %113, %98 : vector<2x32xf32>
    %127 = arith.addf %125, %126 : vector<2x32xf32>
    %128 = arith.truncf %127 : vector<2x32xf32> to vector<2x32xbf16>
    %cst_32 = arith.constant dense<0.000000e+00> : vector<2x96xf32>
    %129 = tpu.matmul %128, %1, %cst_32 {dimension_numbers = #tpu.dot_dimension_numbers<[1], [0], [0], [1], [0, 0, 1, 1], [], []>} : vector<2x32xbf16>, vector<32x96xbf16>, vector<2x96xf32> -> vector<2x96xf32>
    %130 = vector.extract_strided_slice %10 {offsets = [8, 0], sizes = [2, 96], strides = [1, 1]} : vector<16x96xf32> to vector<2x96xf32>
    %131 = vector.extract_strided_slice %130 {offsets = [0, 0], sizes = [2, 64], strides = [1, 1]} : vector<2x96xf32> to vector<2x64xf32>
    %132 = vector.extract_strided_slice %129 {offsets = [0, 0], sizes = [2, 64], strides = [1, 1]} : vector<2x96xf32> to vector<2x64xf32>
    %133 = arith.addf %131, %132 : vector<2x64xf32>
    %134 = vector.broadcast %3 : vector<1x64xf32> to vector<2x64xf32>
    %135 = arith.addf %133, %134 : vector<2x64xf32>
    %136 = arith.negf %135 : vector<2x64xf32>
    %137 = math.exp %136 : vector<2x64xf32>
    %cst_33 = arith.constant 1.000000e+00 : f32
    %138 = vector.broadcast %cst_33 : f32 to vector<2x64xf32>
    %139 = arith.addf %138, %137 : vector<2x64xf32>
    %140 = arith.divf %138, %139 : vector<2x64xf32>
    %141 = vector.extract_strided_slice %140 {offsets = [0, 0], sizes = [2, 32], strides = [1, 1]} : vector<2x64xf32> to vector<2x32xf32>
    %142 = vector.extract_strided_slice %140 {offsets = [0, 32], sizes = [2, 32], strides = [1, 1]} : vector<2x64xf32> to vector<2x32xf32>
    %143 = vector.extract_strided_slice %130 {offsets = [0, 64], sizes = [2, 32], strides = [1, 1]} : vector<2x96xf32> to vector<2x32xf32>
    %144 = vector.broadcast %4 : vector<1x32xf32> to vector<2x32xf32>
    %145 = arith.addf %143, %144 : vector<2x32xf32>
    %146 = vector.extract_strided_slice %129 {offsets = [0, 64], sizes = [2, 32], strides = [1, 1]} : vector<2x96xf32> to vector<2x32xf32>
    %147 = vector.broadcast %5 : vector<1x32xf32> to vector<2x32xf32>
    %148 = arith.addf %146, %147 : vector<2x32xf32>
    %149 = arith.mulf %141, %148 : vector<2x32xf32>
    %150 = arith.addf %145, %149 : vector<2x32xf32>
    %151 = math.tanh %150 : vector<2x32xf32>
    %cst_34 = arith.constant 1.000000e+00 : f32
    %152 = vector.broadcast %cst_34 : f32 to vector<2x32xf32>
    %153 = arith.subf %152, %142 : vector<2x32xf32>
    %154 = arith.mulf %153, %151 : vector<2x32xf32>
    %155 = arith.mulf %142, %127 : vector<2x32xf32>
    %156 = arith.addf %154, %155 : vector<2x32xf32>
    %157 = arith.truncf %156 : vector<2x32xf32> to vector<2x32xbf16>
    %cst_35 = arith.constant dense<0.000000e+00> : vector<2x96xf32>
    %158 = tpu.matmul %157, %1, %cst_35 {dimension_numbers = #tpu.dot_dimension_numbers<[1], [0], [0], [1], [0, 0, 1, 1], [], []>} : vector<2x32xbf16>, vector<32x96xbf16>, vector<2x96xf32> -> vector<2x96xf32>
    %159 = vector.extract_strided_slice %10 {offsets = [10, 0], sizes = [2, 96], strides = [1, 1]} : vector<16x96xf32> to vector<2x96xf32>
    %160 = vector.extract_strided_slice %159 {offsets = [0, 0], sizes = [2, 64], strides = [1, 1]} : vector<2x96xf32> to vector<2x64xf32>
    %161 = vector.extract_strided_slice %158 {offsets = [0, 0], sizes = [2, 64], strides = [1, 1]} : vector<2x96xf32> to vector<2x64xf32>
    %162 = arith.addf %160, %161 : vector<2x64xf32>
    %163 = vector.broadcast %3 : vector<1x64xf32> to vector<2x64xf32>
    %164 = arith.addf %162, %163 : vector<2x64xf32>
    %165 = arith.negf %164 : vector<2x64xf32>
    %166 = math.exp %165 : vector<2x64xf32>
    %cst_36 = arith.constant 1.000000e+00 : f32
    %167 = vector.broadcast %cst_36 : f32 to vector<2x64xf32>
    %168 = arith.addf %167, %166 : vector<2x64xf32>
    %169 = arith.divf %167, %168 : vector<2x64xf32>
    %170 = vector.extract_strided_slice %169 {offsets = [0, 0], sizes = [2, 32], strides = [1, 1]} : vector<2x64xf32> to vector<2x32xf32>
    %171 = vector.extract_strided_slice %169 {offsets = [0, 32], sizes = [2, 32], strides = [1, 1]} : vector<2x64xf32> to vector<2x32xf32>
    %172 = vector.extract_strided_slice %159 {offsets = [0, 64], sizes = [2, 32], strides = [1, 1]} : vector<2x96xf32> to vector<2x32xf32>
    %173 = vector.broadcast %4 : vector<1x32xf32> to vector<2x32xf32>
    %174 = arith.addf %172, %173 : vector<2x32xf32>
    %175 = vector.extract_strided_slice %158 {offsets = [0, 64], sizes = [2, 32], strides = [1, 1]} : vector<2x96xf32> to vector<2x32xf32>
    %176 = vector.broadcast %5 : vector<1x32xf32> to vector<2x32xf32>
    %177 = arith.addf %175, %176 : vector<2x32xf32>
    %178 = arith.mulf %170, %177 : vector<2x32xf32>
    %179 = arith.addf %174, %178 : vector<2x32xf32>
    %180 = math.tanh %179 : vector<2x32xf32>
    %cst_37 = arith.constant 1.000000e+00 : f32
    %181 = vector.broadcast %cst_37 : f32 to vector<2x32xf32>
    %182 = arith.subf %181, %171 : vector<2x32xf32>
    %183 = arith.mulf %182, %180 : vector<2x32xf32>
    %184 = arith.mulf %171, %156 : vector<2x32xf32>
    %185 = arith.addf %183, %184 : vector<2x32xf32>
    %186 = arith.truncf %185 : vector<2x32xf32> to vector<2x32xbf16>
    %cst_38 = arith.constant dense<0.000000e+00> : vector<2x96xf32>
    %187 = tpu.matmul %186, %1, %cst_38 {dimension_numbers = #tpu.dot_dimension_numbers<[1], [0], [0], [1], [0, 0, 1, 1], [], []>} : vector<2x32xbf16>, vector<32x96xbf16>, vector<2x96xf32> -> vector<2x96xf32>
    %188 = vector.extract_strided_slice %10 {offsets = [12, 0], sizes = [2, 96], strides = [1, 1]} : vector<16x96xf32> to vector<2x96xf32>
    %189 = vector.extract_strided_slice %188 {offsets = [0, 0], sizes = [2, 64], strides = [1, 1]} : vector<2x96xf32> to vector<2x64xf32>
    %190 = vector.extract_strided_slice %187 {offsets = [0, 0], sizes = [2, 64], strides = [1, 1]} : vector<2x96xf32> to vector<2x64xf32>
    %191 = arith.addf %189, %190 : vector<2x64xf32>
    %192 = vector.broadcast %3 : vector<1x64xf32> to vector<2x64xf32>
    %193 = arith.addf %191, %192 : vector<2x64xf32>
    %194 = arith.negf %193 : vector<2x64xf32>
    %195 = math.exp %194 : vector<2x64xf32>
    %cst_39 = arith.constant 1.000000e+00 : f32
    %196 = vector.broadcast %cst_39 : f32 to vector<2x64xf32>
    %197 = arith.addf %196, %195 : vector<2x64xf32>
    %198 = arith.divf %196, %197 : vector<2x64xf32>
    %199 = vector.extract_strided_slice %198 {offsets = [0, 0], sizes = [2, 32], strides = [1, 1]} : vector<2x64xf32> to vector<2x32xf32>
    %200 = vector.extract_strided_slice %198 {offsets = [0, 32], sizes = [2, 32], strides = [1, 1]} : vector<2x64xf32> to vector<2x32xf32>
    %201 = vector.extract_strided_slice %188 {offsets = [0, 64], sizes = [2, 32], strides = [1, 1]} : vector<2x96xf32> to vector<2x32xf32>
    %202 = vector.broadcast %4 : vector<1x32xf32> to vector<2x32xf32>
    %203 = arith.addf %201, %202 : vector<2x32xf32>
    %204 = vector.extract_strided_slice %187 {offsets = [0, 64], sizes = [2, 32], strides = [1, 1]} : vector<2x96xf32> to vector<2x32xf32>
    %205 = vector.broadcast %5 : vector<1x32xf32> to vector<2x32xf32>
    %206 = arith.addf %204, %205 : vector<2x32xf32>
    %207 = arith.mulf %199, %206 : vector<2x32xf32>
    %208 = arith.addf %203, %207 : vector<2x32xf32>
    %209 = math.tanh %208 : vector<2x32xf32>
    %cst_40 = arith.constant 1.000000e+00 : f32
    %210 = vector.broadcast %cst_40 : f32 to vector<2x32xf32>
    %211 = arith.subf %210, %200 : vector<2x32xf32>
    %212 = arith.mulf %211, %209 : vector<2x32xf32>
    %213 = arith.mulf %200, %185 : vector<2x32xf32>
    %214 = arith.addf %212, %213 : vector<2x32xf32>
    %215 = arith.truncf %214 : vector<2x32xf32> to vector<2x32xbf16>
    %cst_41 = arith.constant dense<0.000000e+00> : vector<2x96xf32>
    %216 = tpu.matmul %215, %1, %cst_41 {dimension_numbers = #tpu.dot_dimension_numbers<[1], [0], [0], [1], [0, 0, 1, 1], [], []>} : vector<2x32xbf16>, vector<32x96xbf16>, vector<2x96xf32> -> vector<2x96xf32>
    %217 = vector.extract_strided_slice %10 {offsets = [14, 0], sizes = [2, 96], strides = [1, 1]} : vector<16x96xf32> to vector<2x96xf32>
    %218 = vector.extract_strided_slice %217 {offsets = [0, 0], sizes = [2, 64], strides = [1, 1]} : vector<2x96xf32> to vector<2x64xf32>
    %219 = vector.extract_strided_slice %216 {offsets = [0, 0], sizes = [2, 64], strides = [1, 1]} : vector<2x96xf32> to vector<2x64xf32>
    %220 = arith.addf %218, %219 : vector<2x64xf32>
    %221 = vector.broadcast %3 : vector<1x64xf32> to vector<2x64xf32>
    %222 = arith.addf %220, %221 : vector<2x64xf32>
    %223 = arith.negf %222 : vector<2x64xf32>
    %224 = math.exp %223 : vector<2x64xf32>
    %cst_42 = arith.constant 1.000000e+00 : f32
    %225 = vector.broadcast %cst_42 : f32 to vector<2x64xf32>
    %226 = arith.addf %225, %224 : vector<2x64xf32>
    %227 = arith.divf %225, %226 : vector<2x64xf32>
    %228 = vector.extract_strided_slice %227 {offsets = [0, 0], sizes = [2, 32], strides = [1, 1]} : vector<2x64xf32> to vector<2x32xf32>
    %229 = vector.extract_strided_slice %227 {offsets = [0, 32], sizes = [2, 32], strides = [1, 1]} : vector<2x64xf32> to vector<2x32xf32>
    %230 = vector.extract_strided_slice %217 {offsets = [0, 64], sizes = [2, 32], strides = [1, 1]} : vector<2x96xf32> to vector<2x32xf32>
    %231 = vector.broadcast %4 : vector<1x32xf32> to vector<2x32xf32>
    %232 = arith.addf %230, %231 : vector<2x32xf32>
    %233 = vector.extract_strided_slice %216 {offsets = [0, 64], sizes = [2, 32], strides = [1, 1]} : vector<2x96xf32> to vector<2x32xf32>
    %234 = vector.broadcast %5 : vector<1x32xf32> to vector<2x32xf32>
    %235 = arith.addf %233, %234 : vector<2x32xf32>
    %236 = arith.mulf %228, %235 : vector<2x32xf32>
    %237 = arith.addf %232, %236 : vector<2x32xf32>
    %238 = math.tanh %237 : vector<2x32xf32>
    %cst_43 = arith.constant 1.000000e+00 : f32
    %239 = vector.broadcast %cst_43 : f32 to vector<2x32xf32>
    %240 = arith.subf %239, %229 : vector<2x32xf32>
    %241 = arith.mulf %240, %238 : vector<2x32xf32>
    %242 = arith.mulf %229, %214 : vector<2x32xf32>
    %243 = arith.addf %241, %242 : vector<2x32xf32>
    %244 = tpu.concatenate %40, %69, %98, %127, %156, %185, %214, %243 in 0 : vector<2x32xf32>, vector<2x32xf32>, vector<2x32xf32>, vector<2x32xf32>, vector<2x32xf32>, vector<2x32xf32>, vector<2x32xf32>, vector<2x32xf32> -> vector<16x32xf32>
    %245 = arith.truncf %244 : vector<16x32xf32> to vector<16x32xbf16>
    %c0_44 = arith.constant 0 : index
    %c0_45 = arith.constant 0 : index
    %246 = vector.load %arg6[%c0_44, %c0_45] : memref<32x96xbf16, #tpu.memory_space<vmem>>, vector<32x96xbf16>
    %cst_46 = arith.constant dense<0.000000e+00> : vector<16x96xf32>
    %247 = tpu.matmul %245, %246, %cst_46 {dimension_numbers = #tpu.dot_dimension_numbers<[1], [0], [0], [1], [0, 0, 1, 1], [], []>} : vector<16x32xbf16>, vector<32x96xbf16>, vector<16x96xf32> -> vector<16x96xf32>
    %cst_47 = arith.constant 0.000000e+00 : f32
    %248 = vector.broadcast %cst_47 : f32 to vector<2x32xf32>
    %249 = arith.truncf %248 : vector<2x32xf32> to vector<2x32xbf16>
    %cst_48 = arith.constant dense<0.000000e+00> : vector<2x96xf32>
    %250 = tpu.matmul %249, %2, %cst_48 {dimension_numbers = #tpu.dot_dimension_numbers<[1], [0], [0], [1], [0, 0, 1, 1], [], []>} : vector<2x32xbf16>, vector<32x96xbf16>, vector<2x96xf32> -> vector<2x96xf32>
    %251 = vector.extract_strided_slice %247 {offsets = [0, 0], sizes = [2, 96], strides = [1, 1]} : vector<16x96xf32> to vector<2x96xf32>
    %252 = vector.extract_strided_slice %251 {offsets = [0, 0], sizes = [2, 64], strides = [1, 1]} : vector<2x96xf32> to vector<2x64xf32>
    %253 = vector.extract_strided_slice %250 {offsets = [0, 0], sizes = [2, 64], strides = [1, 1]} : vector<2x96xf32> to vector<2x64xf32>
    %254 = arith.addf %252, %253 : vector<2x64xf32>
    %255 = vector.broadcast %6 : vector<1x64xf32> to vector<2x64xf32>
    %256 = arith.addf %254, %255 : vector<2x64xf32>
    %257 = arith.negf %256 : vector<2x64xf32>
    %258 = math.exp %257 : vector<2x64xf32>
    %cst_49 = arith.constant 1.000000e+00 : f32
    %259 = vector.broadcast %cst_49 : f32 to vector<2x64xf32>
    %260 = arith.addf %259, %258 : vector<2x64xf32>
    %261 = arith.divf %259, %260 : vector<2x64xf32>
    %262 = vector.extract_strided_slice %261 {offsets = [0, 0], sizes = [2, 32], strides = [1, 1]} : vector<2x64xf32> to vector<2x32xf32>
    %263 = vector.extract_strided_slice %261 {offsets = [0, 32], sizes = [2, 32], strides = [1, 1]} : vector<2x64xf32> to vector<2x32xf32>
    %264 = vector.extract_strided_slice %251 {offsets = [0, 64], sizes = [2, 32], strides = [1, 1]} : vector<2x96xf32> to vector<2x32xf32>
    %265 = vector.broadcast %7 : vector<1x32xf32> to vector<2x32xf32>
    %266 = arith.addf %264, %265 : vector<2x32xf32>
    %267 = vector.extract_strided_slice %250 {offsets = [0, 64], sizes = [2, 32], strides = [1, 1]} : vector<2x96xf32> to vector<2x32xf32>
    %268 = vector.broadcast %8 : vector<1x32xf32> to vector<2x32xf32>
    %269 = arith.addf %267, %268 : vector<2x32xf32>
    %270 = arith.mulf %262, %269 : vector<2x32xf32>
    %271 = arith.addf %266, %270 : vector<2x32xf32>
    %272 = math.tanh %271 : vector<2x32xf32>
    %cst_50 = arith.constant 1.000000e+00 : f32
    %273 = vector.broadcast %cst_50 : f32 to vector<2x32xf32>
    %274 = arith.subf %273, %263 : vector<2x32xf32>
    %275 = arith.mulf %274, %272 : vector<2x32xf32>
    %276 = arith.mulf %263, %248 : vector<2x32xf32>
    %277 = arith.addf %275, %276 : vector<2x32xf32>
    %278 = arith.truncf %277 : vector<2x32xf32> to vector<2x32xbf16>
    %cst_51 = arith.constant dense<0.000000e+00> : vector<2x96xf32>
    %279 = tpu.matmul %278, %2, %cst_51 {dimension_numbers = #tpu.dot_dimension_numbers<[1], [0], [0], [1], [0, 0, 1, 1], [], []>} : vector<2x32xbf16>, vector<32x96xbf16>, vector<2x96xf32> -> vector<2x96xf32>
    %280 = vector.extract_strided_slice %247 {offsets = [2, 0], sizes = [2, 96], strides = [1, 1]} : vector<16x96xf32> to vector<2x96xf32>
    %281 = vector.extract_strided_slice %280 {offsets = [0, 0], sizes = [2, 64], strides = [1, 1]} : vector<2x96xf32> to vector<2x64xf32>
    %282 = vector.extract_strided_slice %279 {offsets = [0, 0], sizes = [2, 64], strides = [1, 1]} : vector<2x96xf32> to vector<2x64xf32>
    %283 = arith.addf %281, %282 : vector<2x64xf32>
    %284 = vector.broadcast %6 : vector<1x64xf32> to vector<2x64xf32>
    %285 = arith.addf %283, %284 : vector<2x64xf32>
    %286 = arith.negf %285 : vector<2x64xf32>
    %287 = math.exp %286 : vector<2x64xf32>
    %cst_52 = arith.constant 1.000000e+00 : f32
    %288 = vector.broadcast %cst_52 : f32 to vector<2x64xf32>
    %289 = arith.addf %288, %287 : vector<2x64xf32>
    %290 = arith.divf %288, %289 : vector<2x64xf32>
    %291 = vector.extract_strided_slice %290 {offsets = [0, 0], sizes = [2, 32], strides = [1, 1]} : vector<2x64xf32> to vector<2x32xf32>
    %292 = vector.extract_strided_slice %290 {offsets = [0, 32], sizes = [2, 32], strides = [1, 1]} : vector<2x64xf32> to vector<2x32xf32>
    %293 = vector.extract_strided_slice %280 {offsets = [0, 64], sizes = [2, 32], strides = [1, 1]} : vector<2x96xf32> to vector<2x32xf32>
    %294 = vector.broadcast %7 : vector<1x32xf32> to vector<2x32xf32>
    %295 = arith.addf %293, %294 : vector<2x32xf32>
    %296 = vector.extract_strided_slice %279 {offsets = [0, 64], sizes = [2, 32], strides = [1, 1]} : vector<2x96xf32> to vector<2x32xf32>
    %297 = vector.broadcast %8 : vector<1x32xf32> to vector<2x32xf32>
    %298 = arith.addf %296, %297 : vector<2x32xf32>
    %299 = arith.mulf %291, %298 : vector<2x32xf32>
    %300 = arith.addf %295, %299 : vector<2x32xf32>
    %301 = math.tanh %300 : vector<2x32xf32>
    %cst_53 = arith.constant 1.000000e+00 : f32
    %302 = vector.broadcast %cst_53 : f32 to vector<2x32xf32>
    %303 = arith.subf %302, %292 : vector<2x32xf32>
    %304 = arith.mulf %303, %301 : vector<2x32xf32>
    %305 = arith.mulf %292, %277 : vector<2x32xf32>
    %306 = arith.addf %304, %305 : vector<2x32xf32>
    %307 = arith.truncf %306 : vector<2x32xf32> to vector<2x32xbf16>
    %cst_54 = arith.constant dense<0.000000e+00> : vector<2x96xf32>
    %308 = tpu.matmul %307, %2, %cst_54 {dimension_numbers = #tpu.dot_dimension_numbers<[1], [0], [0], [1], [0, 0, 1, 1], [], []>} : vector<2x32xbf16>, vector<32x96xbf16>, vector<2x96xf32> -> vector<2x96xf32>
    %309 = vector.extract_strided_slice %247 {offsets = [4, 0], sizes = [2, 96], strides = [1, 1]} : vector<16x96xf32> to vector<2x96xf32>
    %310 = vector.extract_strided_slice %309 {offsets = [0, 0], sizes = [2, 64], strides = [1, 1]} : vector<2x96xf32> to vector<2x64xf32>
    %311 = vector.extract_strided_slice %308 {offsets = [0, 0], sizes = [2, 64], strides = [1, 1]} : vector<2x96xf32> to vector<2x64xf32>
    %312 = arith.addf %310, %311 : vector<2x64xf32>
    %313 = vector.broadcast %6 : vector<1x64xf32> to vector<2x64xf32>
    %314 = arith.addf %312, %313 : vector<2x64xf32>
    %315 = arith.negf %314 : vector<2x64xf32>
    %316 = math.exp %315 : vector<2x64xf32>
    %cst_55 = arith.constant 1.000000e+00 : f32
    %317 = vector.broadcast %cst_55 : f32 to vector<2x64xf32>
    %318 = arith.addf %317, %316 : vector<2x64xf32>
    %319 = arith.divf %317, %318 : vector<2x64xf32>
    %320 = vector.extract_strided_slice %319 {offsets = [0, 0], sizes = [2, 32], strides = [1, 1]} : vector<2x64xf32> to vector<2x32xf32>
    %321 = vector.extract_strided_slice %319 {offsets = [0, 32], sizes = [2, 32], strides = [1, 1]} : vector<2x64xf32> to vector<2x32xf32>
    %322 = vector.extract_strided_slice %309 {offsets = [0, 64], sizes = [2, 32], strides = [1, 1]} : vector<2x96xf32> to vector<2x32xf32>
    %323 = vector.broadcast %7 : vector<1x32xf32> to vector<2x32xf32>
    %324 = arith.addf %322, %323 : vector<2x32xf32>
    %325 = vector.extract_strided_slice %308 {offsets = [0, 64], sizes = [2, 32], strides = [1, 1]} : vector<2x96xf32> to vector<2x32xf32>
    %326 = vector.broadcast %8 : vector<1x32xf32> to vector<2x32xf32>
    %327 = arith.addf %325, %326 : vector<2x32xf32>
    %328 = arith.mulf %320, %327 : vector<2x32xf32>
    %329 = arith.addf %324, %328 : vector<2x32xf32>
    %330 = math.tanh %329 : vector<2x32xf32>
    %cst_56 = arith.constant 1.000000e+00 : f32
    %331 = vector.broadcast %cst_56 : f32 to vector<2x32xf32>
    %332 = arith.subf %331, %321 : vector<2x32xf32>
    %333 = arith.mulf %332, %330 : vector<2x32xf32>
    %334 = arith.mulf %321, %306 : vector<2x32xf32>
    %335 = arith.addf %333, %334 : vector<2x32xf32>
    %336 = arith.truncf %335 : vector<2x32xf32> to vector<2x32xbf16>
    %cst_57 = arith.constant dense<0.000000e+00> : vector<2x96xf32>
    %337 = tpu.matmul %336, %2, %cst_57 {dimension_numbers = #tpu.dot_dimension_numbers<[1], [0], [0], [1], [0, 0, 1, 1], [], []>} : vector<2x32xbf16>, vector<32x96xbf16>, vector<2x96xf32> -> vector<2x96xf32>
    %338 = vector.extract_strided_slice %247 {offsets = [6, 0], sizes = [2, 96], strides = [1, 1]} : vector<16x96xf32> to vector<2x96xf32>
    %339 = vector.extract_strided_slice %338 {offsets = [0, 0], sizes = [2, 64], strides = [1, 1]} : vector<2x96xf32> to vector<2x64xf32>
    %340 = vector.extract_strided_slice %337 {offsets = [0, 0], sizes = [2, 64], strides = [1, 1]} : vector<2x96xf32> to vector<2x64xf32>
    %341 = arith.addf %339, %340 : vector<2x64xf32>
    %342 = vector.broadcast %6 : vector<1x64xf32> to vector<2x64xf32>
    %343 = arith.addf %341, %342 : vector<2x64xf32>
    %344 = arith.negf %343 : vector<2x64xf32>
    %345 = math.exp %344 : vector<2x64xf32>
    %cst_58 = arith.constant 1.000000e+00 : f32
    %346 = vector.broadcast %cst_58 : f32 to vector<2x64xf32>
    %347 = arith.addf %346, %345 : vector<2x64xf32>
    %348 = arith.divf %346, %347 : vector<2x64xf32>
    %349 = vector.extract_strided_slice %348 {offsets = [0, 0], sizes = [2, 32], strides = [1, 1]} : vector<2x64xf32> to vector<2x32xf32>
    %350 = vector.extract_strided_slice %348 {offsets = [0, 32], sizes = [2, 32], strides = [1, 1]} : vector<2x64xf32> to vector<2x32xf32>
    %351 = vector.extract_strided_slice %338 {offsets = [0, 64], sizes = [2, 32], strides = [1, 1]} : vector<2x96xf32> to vector<2x32xf32>
    %352 = vector.broadcast %7 : vector<1x32xf32> to vector<2x32xf32>
    %353 = arith.addf %351, %352 : vector<2x32xf32>
    %354 = vector.extract_strided_slice %337 {offsets = [0, 64], sizes = [2, 32], strides = [1, 1]} : vector<2x96xf32> to vector<2x32xf32>
    %355 = vector.broadcast %8 : vector<1x32xf32> to vector<2x32xf32>
    %356 = arith.addf %354, %355 : vector<2x32xf32>
    %357 = arith.mulf %349, %356 : vector<2x32xf32>
    %358 = arith.addf %353, %357 : vector<2x32xf32>
    %359 = math.tanh %358 : vector<2x32xf32>
    %cst_59 = arith.constant 1.000000e+00 : f32
    %360 = vector.broadcast %cst_59 : f32 to vector<2x32xf32>
    %361 = arith.subf %360, %350 : vector<2x32xf32>
    %362 = arith.mulf %361, %359 : vector<2x32xf32>
    %363 = arith.mulf %350, %335 : vector<2x32xf32>
    %364 = arith.addf %362, %363 : vector<2x32xf32>
    %365 = arith.truncf %364 : vector<2x32xf32> to vector<2x32xbf16>
    %cst_60 = arith.constant dense<0.000000e+00> : vector<2x96xf32>
    %366 = tpu.matmul %365, %2, %cst_60 {dimension_numbers = #tpu.dot_dimension_numbers<[1], [0], [0], [1], [0, 0, 1, 1], [], []>} : vector<2x32xbf16>, vector<32x96xbf16>, vector<2x96xf32> -> vector<2x96xf32>
    %367 = vector.extract_strided_slice %247 {offsets = [8, 0], sizes = [2, 96], strides = [1, 1]} : vector<16x96xf32> to vector<2x96xf32>
    %368 = vector.extract_strided_slice %367 {offsets = [0, 0], sizes = [2, 64], strides = [1, 1]} : vector<2x96xf32> to vector<2x64xf32>
    %369 = vector.extract_strided_slice %366 {offsets = [0, 0], sizes = [2, 64], strides = [1, 1]} : vector<2x96xf32> to vector<2x64xf32>
    %370 = arith.addf %368, %369 : vector<2x64xf32>
    %371 = vector.broadcast %6 : vector<1x64xf32> to vector<2x64xf32>
    %372 = arith.addf %370, %371 : vector<2x64xf32>
    %373 = arith.negf %372 : vector<2x64xf32>
    %374 = math.exp %373 : vector<2x64xf32>
    %cst_61 = arith.constant 1.000000e+00 : f32
    %375 = vector.broadcast %cst_61 : f32 to vector<2x64xf32>
    %376 = arith.addf %375, %374 : vector<2x64xf32>
    %377 = arith.divf %375, %376 : vector<2x64xf32>
    %378 = vector.extract_strided_slice %377 {offsets = [0, 0], sizes = [2, 32], strides = [1, 1]} : vector<2x64xf32> to vector<2x32xf32>
    %379 = vector.extract_strided_slice %377 {offsets = [0, 32], sizes = [2, 32], strides = [1, 1]} : vector<2x64xf32> to vector<2x32xf32>
    %380 = vector.extract_strided_slice %367 {offsets = [0, 64], sizes = [2, 32], strides = [1, 1]} : vector<2x96xf32> to vector<2x32xf32>
    %381 = vector.broadcast %7 : vector<1x32xf32> to vector<2x32xf32>
    %382 = arith.addf %380, %381 : vector<2x32xf32>
    %383 = vector.extract_strided_slice %366 {offsets = [0, 64], sizes = [2, 32], strides = [1, 1]} : vector<2x96xf32> to vector<2x32xf32>
    %384 = vector.broadcast %8 : vector<1x32xf32> to vector<2x32xf32>
    %385 = arith.addf %383, %384 : vector<2x32xf32>
    %386 = arith.mulf %378, %385 : vector<2x32xf32>
    %387 = arith.addf %382, %386 : vector<2x32xf32>
    %388 = math.tanh %387 : vector<2x32xf32>
    %cst_62 = arith.constant 1.000000e+00 : f32
    %389 = vector.broadcast %cst_62 : f32 to vector<2x32xf32>
    %390 = arith.subf %389, %379 : vector<2x32xf32>
    %391 = arith.mulf %390, %388 : vector<2x32xf32>
    %392 = arith.mulf %379, %364 : vector<2x32xf32>
    %393 = arith.addf %391, %392 : vector<2x32xf32>
    %394 = arith.truncf %393 : vector<2x32xf32> to vector<2x32xbf16>
    %cst_63 = arith.constant dense<0.000000e+00> : vector<2x96xf32>
    %395 = tpu.matmul %394, %2, %cst_63 {dimension_numbers = #tpu.dot_dimension_numbers<[1], [0], [0], [1], [0, 0, 1, 1], [], []>} : vector<2x32xbf16>, vector<32x96xbf16>, vector<2x96xf32> -> vector<2x96xf32>
    %396 = vector.extract_strided_slice %247 {offsets = [10, 0], sizes = [2, 96], strides = [1, 1]} : vector<16x96xf32> to vector<2x96xf32>
    %397 = vector.extract_strided_slice %396 {offsets = [0, 0], sizes = [2, 64], strides = [1, 1]} : vector<2x96xf32> to vector<2x64xf32>
    %398 = vector.extract_strided_slice %395 {offsets = [0, 0], sizes = [2, 64], strides = [1, 1]} : vector<2x96xf32> to vector<2x64xf32>
    %399 = arith.addf %397, %398 : vector<2x64xf32>
    %400 = vector.broadcast %6 : vector<1x64xf32> to vector<2x64xf32>
    %401 = arith.addf %399, %400 : vector<2x64xf32>
    %402 = arith.negf %401 : vector<2x64xf32>
    %403 = math.exp %402 : vector<2x64xf32>
    %cst_64 = arith.constant 1.000000e+00 : f32
    %404 = vector.broadcast %cst_64 : f32 to vector<2x64xf32>
    %405 = arith.addf %404, %403 : vector<2x64xf32>
    %406 = arith.divf %404, %405 : vector<2x64xf32>
    %407 = vector.extract_strided_slice %406 {offsets = [0, 0], sizes = [2, 32], strides = [1, 1]} : vector<2x64xf32> to vector<2x32xf32>
    %408 = vector.extract_strided_slice %406 {offsets = [0, 32], sizes = [2, 32], strides = [1, 1]} : vector<2x64xf32> to vector<2x32xf32>
    %409 = vector.extract_strided_slice %396 {offsets = [0, 64], sizes = [2, 32], strides = [1, 1]} : vector<2x96xf32> to vector<2x32xf32>
    %410 = vector.broadcast %7 : vector<1x32xf32> to vector<2x32xf32>
    %411 = arith.addf %409, %410 : vector<2x32xf32>
    %412 = vector.extract_strided_slice %395 {offsets = [0, 64], sizes = [2, 32], strides = [1, 1]} : vector<2x96xf32> to vector<2x32xf32>
    %413 = vector.broadcast %8 : vector<1x32xf32> to vector<2x32xf32>
    %414 = arith.addf %412, %413 : vector<2x32xf32>
    %415 = arith.mulf %407, %414 : vector<2x32xf32>
    %416 = arith.addf %411, %415 : vector<2x32xf32>
    %417 = math.tanh %416 : vector<2x32xf32>
    %cst_65 = arith.constant 1.000000e+00 : f32
    %418 = vector.broadcast %cst_65 : f32 to vector<2x32xf32>
    %419 = arith.subf %418, %408 : vector<2x32xf32>
    %420 = arith.mulf %419, %417 : vector<2x32xf32>
    %421 = arith.mulf %408, %393 : vector<2x32xf32>
    %422 = arith.addf %420, %421 : vector<2x32xf32>
    %423 = arith.truncf %422 : vector<2x32xf32> to vector<2x32xbf16>
    %cst_66 = arith.constant dense<0.000000e+00> : vector<2x96xf32>
    %424 = tpu.matmul %423, %2, %cst_66 {dimension_numbers = #tpu.dot_dimension_numbers<[1], [0], [0], [1], [0, 0, 1, 1], [], []>} : vector<2x32xbf16>, vector<32x96xbf16>, vector<2x96xf32> -> vector<2x96xf32>
    %425 = vector.extract_strided_slice %247 {offsets = [12, 0], sizes = [2, 96], strides = [1, 1]} : vector<16x96xf32> to vector<2x96xf32>
    %426 = vector.extract_strided_slice %425 {offsets = [0, 0], sizes = [2, 64], strides = [1, 1]} : vector<2x96xf32> to vector<2x64xf32>
    %427 = vector.extract_strided_slice %424 {offsets = [0, 0], sizes = [2, 64], strides = [1, 1]} : vector<2x96xf32> to vector<2x64xf32>
    %428 = arith.addf %426, %427 : vector<2x64xf32>
    %429 = vector.broadcast %6 : vector<1x64xf32> to vector<2x64xf32>
    %430 = arith.addf %428, %429 : vector<2x64xf32>
    %431 = arith.negf %430 : vector<2x64xf32>
    %432 = math.exp %431 : vector<2x64xf32>
    %cst_67 = arith.constant 1.000000e+00 : f32
    %433 = vector.broadcast %cst_67 : f32 to vector<2x64xf32>
    %434 = arith.addf %433, %432 : vector<2x64xf32>
    %435 = arith.divf %433, %434 : vector<2x64xf32>
    %436 = vector.extract_strided_slice %435 {offsets = [0, 0], sizes = [2, 32], strides = [1, 1]} : vector<2x64xf32> to vector<2x32xf32>
    %437 = vector.extract_strided_slice %435 {offsets = [0, 32], sizes = [2, 32], strides = [1, 1]} : vector<2x64xf32> to vector<2x32xf32>
    %438 = vector.extract_strided_slice %425 {offsets = [0, 64], sizes = [2, 32], strides = [1, 1]} : vector<2x96xf32> to vector<2x32xf32>
    %439 = vector.broadcast %7 : vector<1x32xf32> to vector<2x32xf32>
    %440 = arith.addf %438, %439 : vector<2x32xf32>
    %441 = vector.extract_strided_slice %424 {offsets = [0, 64], sizes = [2, 32], strides = [1, 1]} : vector<2x96xf32> to vector<2x32xf32>
    %442 = vector.broadcast %8 : vector<1x32xf32> to vector<2x32xf32>
    %443 = arith.addf %441, %442 : vector<2x32xf32>
    %444 = arith.mulf %436, %443 : vector<2x32xf32>
    %445 = arith.addf %440, %444 : vector<2x32xf32>
    %446 = math.tanh %445 : vector<2x32xf32>
    %cst_68 = arith.constant 1.000000e+00 : f32
    %447 = vector.broadcast %cst_68 : f32 to vector<2x32xf32>
    %448 = arith.subf %447, %437 : vector<2x32xf32>
    %449 = arith.mulf %448, %446 : vector<2x32xf32>
    %450 = arith.mulf %437, %422 : vector<2x32xf32>
    %451 = arith.addf %449, %450 : vector<2x32xf32>
    %452 = arith.truncf %451 : vector<2x32xf32> to vector<2x32xbf16>
    %cst_69 = arith.constant dense<0.000000e+00> : vector<2x96xf32>
    %453 = tpu.matmul %452, %2, %cst_69 {dimension_numbers = #tpu.dot_dimension_numbers<[1], [0], [0], [1], [0, 0, 1, 1], [], []>} : vector<2x32xbf16>, vector<32x96xbf16>, vector<2x96xf32> -> vector<2x96xf32>
    %454 = vector.extract_strided_slice %247 {offsets = [14, 0], sizes = [2, 96], strides = [1, 1]} : vector<16x96xf32> to vector<2x96xf32>
    %455 = vector.extract_strided_slice %454 {offsets = [0, 0], sizes = [2, 64], strides = [1, 1]} : vector<2x96xf32> to vector<2x64xf32>
    %456 = vector.extract_strided_slice %453 {offsets = [0, 0], sizes = [2, 64], strides = [1, 1]} : vector<2x96xf32> to vector<2x64xf32>
    %457 = arith.addf %455, %456 : vector<2x64xf32>
    %458 = vector.broadcast %6 : vector<1x64xf32> to vector<2x64xf32>
    %459 = arith.addf %457, %458 : vector<2x64xf32>
    %460 = arith.negf %459 : vector<2x64xf32>
    %461 = math.exp %460 : vector<2x64xf32>
    %cst_70 = arith.constant 1.000000e+00 : f32
    %462 = vector.broadcast %cst_70 : f32 to vector<2x64xf32>
    %463 = arith.addf %462, %461 : vector<2x64xf32>
    %464 = arith.divf %462, %463 : vector<2x64xf32>
    %465 = vector.extract_strided_slice %464 {offsets = [0, 0], sizes = [2, 32], strides = [1, 1]} : vector<2x64xf32> to vector<2x32xf32>
    %466 = vector.extract_strided_slice %464 {offsets = [0, 32], sizes = [2, 32], strides = [1, 1]} : vector<2x64xf32> to vector<2x32xf32>
    %467 = vector.extract_strided_slice %454 {offsets = [0, 64], sizes = [2, 32], strides = [1, 1]} : vector<2x96xf32> to vector<2x32xf32>
    %468 = vector.broadcast %7 : vector<1x32xf32> to vector<2x32xf32>
    %469 = arith.addf %467, %468 : vector<2x32xf32>
    %470 = vector.extract_strided_slice %453 {offsets = [0, 64], sizes = [2, 32], strides = [1, 1]} : vector<2x96xf32> to vector<2x32xf32>
    %471 = vector.broadcast %8 : vector<1x32xf32> to vector<2x32xf32>
    %472 = arith.addf %470, %471 : vector<2x32xf32>
    %473 = arith.mulf %465, %472 : vector<2x32xf32>
    %474 = arith.addf %469, %473 : vector<2x32xf32>
    %475 = math.tanh %474 : vector<2x32xf32>
    %cst_71 = arith.constant 1.000000e+00 : f32
    %476 = vector.broadcast %cst_71 : f32 to vector<2x32xf32>
    %477 = arith.subf %476, %466 : vector<2x32xf32>
    %478 = arith.mulf %477, %475 : vector<2x32xf32>
    %479 = arith.mulf %466, %451 : vector<2x32xf32>
    %480 = arith.addf %478, %479 : vector<2x32xf32>
    %481 = vector.shape_cast %277 : vector<2x32xf32> to vector<1x2x32xf32>
    %482 = vector.shape_cast %306 : vector<2x32xf32> to vector<1x2x32xf32>
    %483 = vector.shape_cast %335 : vector<2x32xf32> to vector<1x2x32xf32>
    %484 = vector.shape_cast %364 : vector<2x32xf32> to vector<1x2x32xf32>
    %485 = vector.shape_cast %393 : vector<2x32xf32> to vector<1x2x32xf32>
    %486 = vector.shape_cast %422 : vector<2x32xf32> to vector<1x2x32xf32>
    %487 = vector.shape_cast %451 : vector<2x32xf32> to vector<1x2x32xf32>
    %488 = vector.shape_cast %480 : vector<2x32xf32> to vector<1x2x32xf32>
    %489 = tpu.concatenate %481, %482, %483, %484, %485, %486, %487, %488 in 0 : vector<1x2x32xf32>, vector<1x2x32xf32>, vector<1x2x32xf32>, vector<1x2x32xf32>, vector<1x2x32xf32>, vector<1x2x32xf32>, vector<1x2x32xf32>, vector<1x2x32xf32> -> vector<8x2x32xf32>
    %c0_72 = arith.constant 0 : index
    %c0_73 = arith.constant 0 : index
    %c0_74 = arith.constant 0 : index
    %490 = vector.load %arg11[%c0_72, %c0_73, %c0_74] : memref<8x2x32xf32, #tpu.memory_space<vmem>>, vector<8x2x32xf32>
    tpu.vector_store %arg11[%c0_72, %c0_73, %c0_74], %489 {strides = array<i32>} : memref<8x2x32xf32, #tpu.memory_space<vmem>>, vector<8x2x32xf32>,
    %491 = vector.shape_cast %243 : vector<2x32xf32> to vector<1x2x32xf32>
    %492 = vector.shape_cast %480 : vector<2x32xf32> to vector<1x2x32xf32>
    %493 = tpu.concatenate %491, %492 in 0 : vector<1x2x32xf32>, vector<1x2x32xf32> -> vector<2x2x32xf32>
    %c0_75 = arith.constant 0 : index
    %c0_76 = arith.constant 0 : index
    %c0_77 = arith.constant 0 : index
    %494 = vector.load %arg12[%c0_75, %c0_76, %c0_77] : memref<2x2x32xf32, #tpu.memory_space<vmem>>, vector<2x2x32xf32>
    tpu.vector_store %arg12[%c0_75, %c0_76, %c0_77], %493 {strides = array<i32>} : memref<2x2x32xf32, #tpu.memory_space<vmem>>, vector<2x2x32xf32>,
    return
  }
}

</mosaic_0001>

<llo_original>
// kernel: tpu_custom_call.1
$region0: #{tpu_custom_call.1}
  #allocation0 [shape = 'u32[]', space=smem, size = 0x4, offset = 0x4, fixed_abs, tag = 'smem constant byte address 0x4 - core index']
  #allocation1 [shape = 'u32[144,128]{1,0:T(1,128)}', space=vmem, size = 0x12000, scoped, tag = 'internal scratch']
  %s0 = inlined_call_operand.hbm [shape: bf16[16,32], index: 0, kind: input, shape index: {}]
  %s1 = inlined_call_operand.hbm [shape: bf16[32,96], index: 1, kind: input, shape index: {}]
  %s2 = inlined_call_operand.hbm [shape: bf16[32,96], index: 2, kind: input, shape index: {}]
  %s3 = inlined_call_operand.vmem [shape: f32[1,64], index: 3, kind: input, shape index: {}]
  %s4 = inlined_call_operand.vmem [shape: f32[1,32], index: 4, kind: input, shape index: {}]
  %s5 = inlined_call_operand.vmem [shape: f32[1,32], index: 5, kind: input, shape index: {}]
  %s6 = inlined_call_operand.hbm [shape: bf16[32,96], index: 6, kind: input, shape index: {}]
  %s7 = inlined_call_operand.hbm [shape: bf16[32,96], index: 7, kind: input, shape index: {}]
  %s8 = inlined_call_operand.vmem [shape: f32[1,64], index: 8, kind: input, shape index: {}]
  %s9 = inlined_call_operand.vmem [shape: f32[1,32], index: 9, kind: input, shape index: {}]
  %s10 = inlined_call_operand.vmem [shape: f32[1,32], index: 10, kind: input, shape index: {}]
  %s11 = inlined_call_operand.hbm [shape: f32[8,2,32], index: 11, kind: output, shape index: {0}]
  %s12 = inlined_call_operand.hbm [shape: f32[2,2,32], index: 12, kind: output, shape index: {1}]
  %13 = xla_tuple %s11, %s12
  %s14 = sld [smem:[#allocation0]]
  $region82: #{tpu_custom_call.1} parent=0
    _
  %s16 = ssub.s32 1, %s14
  %s17 = scalar_select 0, %s16, %s14
  $region1: #{tpu_custom_call.1} parent=0
    #allocation2 [shape = 'u8[4096]{0}', space=vmem, size = 0x1000, scoped, tag = 'input window, operand 0, single buffered']
    #allocation3 [shape = 's32[1]{0}', space=sflag, size = 0x4, scoped, tag = 'scoped memory for tpu_custom_call.1']
    #allocation4 [shape = 's32[1]{0}', space=sflag, size = 0x4, scoped, tag = 'scoped memory for tpu_custom_call.1']
    #allocation5 [shape = 'u8[8192]{0}', space=vmem, size = 0x2000, scoped, tag = 'input window, operand 1, single buffered']
    #allocation6 [shape = 's32[1]{0}', space=sflag, size = 0x4, scoped, tag = 'scoped memory for tpu_custom_call.1']
    #allocation7 [shape = 'u8[8192]{0}', space=vmem, size = 0x2000, scoped, tag = 'input window, operand 2, single buffered']
    #allocation8 [shape = 'u8[8192]{0}', space=vmem, size = 0x2000, scoped, tag = 'input window, operand 6, single buffered']
    #allocation9 [shape = 's32[1]{0}', space=sflag, size = 0x4, scoped, tag = 'scoped memory for tpu_custom_call.1']
    #allocation10 [shape = 'u8[8192]{0}', space=vmem, size = 0x2000, scoped, tag = 'input window, operand 7, single buffered']
    #allocation11 [shape = 'u8[8192]{0}', space=vmem, size = 0x2000, scoped, tag = 'output window, operand 0, single buffered']
    #allocation12 [shape = 'u8[2048]{0}', space=vmem, size = 0x800, scoped, tag = 'output window, operand 1, single buffered']
    #allocation13 [shape = 's32[1]{0}', space=sflag, size = 0x4, scoped, tag = 'scoped memory for tpu_custom_call.1']
    %18 = vsyncpa [#allocation3], 0
    %19 = vsyncpa [#allocation6], 0
    %20 = vsyncpa [#allocation9], 0
    %21 = vsyncpa [#allocation4], 0
    %22 = vsyncpa [#allocation13], 0
    // Predicated region
    $region2: #{tpu_custom_call.1} parent=1 // pred_check
      _
    $region3: #{tpu_custom_call.1} parent=1 // pred_check_branch
      %24 = sbr.rel (0) target = $region5
    $region4: #{tpu_custom_call.1} parent=1 // pred_region
      %s26 = ssub.s32 128, 128
      %27 = vsyncadd [#allocation3], %s26
      %s28 = sshll.u32 [#allocation2], 4
      %s29 = int_to_ptr.vmem [resolvable:$true] %s28
      %34 = dma.hbm_to_vmem [thread:$0]  %s0, 128, %s29, [#allocation3], 64, 64, 4
    $region5: #{tpu_custom_call.1} parent=1 // pred_fallthru
      _
    // Predicated region
    $region6: #{tpu_custom_call.1} parent=1 // pred_check
      _
    $region7: #{tpu_custom_call.1} parent=1 // pred_check_branch
      %36 = sbr.rel (0) target = $region9
    $region8: #{tpu_custom_call.1} parent=1 // pred_region
      %s38 = ssub.s32 256, 256
      %39 = vsyncadd [#allocation6], %s38
      %s40 = sshll.u32 [#allocation5], 4
      %s41 = int_to_ptr.vmem [resolvable:$true] %s40
      %46 = dma.hbm_to_vmem [thread:$0]  %s1, 256, %s41, [#allocation6], 64, 64, 4
    $region9: #{tpu_custom_call.1} parent=1 // pred_fallthru
      _
    // Predicated region
    $region10: #{tpu_custom_call.1} parent=1 // pred_check
      _
    $region11: #{tpu_custom_call.1} parent=1 // pred_check_branch
      %48 = sbr.rel (0) target = $region13
    $region12: #{tpu_custom_call.1} parent=1 // pred_region
      %s50 = ssub.s32 256, 256
      %51 = vsyncadd [#allocation6], %s50
      %s52 = sshll.u32 [#allocation7], 4
      %s53 = int_to_ptr.vmem [resolvable:$true] %s52
      %58 = dma.hbm_to_vmem [thread:$0]  %s2, 256, %s53, [#allocation6], 64, 64, 4
    $region13: #{tpu_custom_call.1} parent=1 // pred_fallthru
      _
    // Predicated region
    $region14: #{tpu_custom_call.1} parent=1 // pred_check
      _
    $region15: #{tpu_custom_call.1} parent=1 // pred_check_branch
      %60 = sbr.rel (0) target = $region17
    $region16: #{tpu_custom_call.1} parent=1 // pred_region
      _
    $region17: #{tpu_custom_call.1} parent=1 // pred_fallthru
      _
    // Predicated region
    $region18: #{tpu_custom_call.1} parent=1 // pred_check
      _
    $region19: #{tpu_custom_call.1} parent=1 // pred_check_branch
      %62 = sbr.rel (0) target = $region21
    $region20: #{tpu_custom_call.1} parent=1 // pred_region
      _
    $region21: #{tpu_custom_call.1} parent=1 // pred_fallthru
      _
    // Predicated region
    $region22: #{tpu_custom_call.1} parent=1 // pred_check
      _
    $region23: #{tpu_custom_call.1} parent=1 // pred_check_branch
      %64 = sbr.rel (0) target = $region25
    $region24: #{tpu_custom_call.1} parent=1 // pred_region
      _
    $region25: #{tpu_custom_call.1} parent=1 // pred_fallthru
      _
    // Predicated region
    $region26: #{tpu_custom_call.1} parent=1 // pred_check
      _
    $region27: #{tpu_custom_call.1} parent=1 // pred_check_branch
      %66 = sbr.rel (0) target = $region29
    $region28: #{tpu_custom_call.1} parent=1 // pred_region
      %s68 = ssub.s32 256, 256
      %69 = vsyncadd [#allocation9], %s68
      %s70 = sshll.u32 [#allocation8], 4
      %s71 = int_to_ptr.vmem [resolvable:$true] %s70
      %76 = dma.hbm_to_vmem [thread:$0]  %s6, 256, %s71, [#allocation9], 64, 64, 4
    $region29: #{tpu_custom_call.1} parent=1 // pred_fallthru
      _
    // Predicated region
    $region30: #{tpu_custom_call.1} parent=1 // pred_check
      _
    $region31: #{tpu_custom_call.1} parent=1 // pred_check_branch
      %78 = sbr.rel (0) target = $region33
    $region32: #{tpu_custom_call.1} parent=1 // pred_region
      %s80 = ssub.s32 256, 256
      %81 = vsyncadd [#allocation9], %s80
      %s82 = sshll.u32 [#allocation10], 4
      %s83 = int_to_ptr.vmem [resolvable:$true] %s82
      %88 = dma.hbm_to_vmem [thread:$0]  %s7, 256, %s83, [#allocation9], 64, 64, 4
    $region33: #{tpu_custom_call.1} parent=1 // pred_fallthru
      _
    // Predicated region
    $region34: #{tpu_custom_call.1} parent=1 // pred_check
      _
    $region35: #{tpu_custom_call.1} parent=1 // pred_check_branch
      %90 = sbr.rel (0) target = $region37
    $region36: #{tpu_custom_call.1} parent=1 // pred_region
      _
    $region37: #{tpu_custom_call.1} parent=1 // pred_fallthru
      _
    // Predicated region
    $region38: #{tpu_custom_call.1} parent=1 // pred_check
      _
    $region39: #{tpu_custom_call.1} parent=1 // pred_check_branch
      %92 = sbr.rel (0) target = $region41
    $region40: #{tpu_custom_call.1} parent=1 // pred_region
      _
    $region41: #{tpu_custom_call.1} parent=1 // pred_fallthru
      _
    // Predicated region
    $region42: #{tpu_custom_call.1} parent=1 // pred_check
      _
    $region43: #{tpu_custom_call.1} parent=1 // pred_check_branch
      %94 = sbr.rel (0) target = $region45
    $region44: #{tpu_custom_call.1} parent=1 // pred_region
      _
    $region45: #{tpu_custom_call.1} parent=1 // pred_fallthru
      _
    // Predicated region
    $region46: #{tpu_custom_call.1} parent=1 // pred_check
      _
    $region47: #{tpu_custom_call.1} parent=1 // pred_check_branch
      %96 = sbr.rel (0) target = $region49
    $region48: #{tpu_custom_call.1} parent=1 // pred_region
      %97 = dma.done [#allocation3], 128
    $region49: #{tpu_custom_call.1} parent=1 // pred_fallthru
      _
    // Predicated region
    $region50: #{tpu_custom_call.1} parent=1 // pred_check
      _
    $region51: #{tpu_custom_call.1} parent=1 // pred_check_branch
      %99 = sbr.rel (0) target = $region53
    $region52: #{tpu_custom_call.1} parent=1 // pred_region
      %100 = dma.done [#allocation6], 256
    $region53: #{tpu_custom_call.1} parent=1 // pred_fallthru
      _
    // Predicated region
    $region54: #{tpu_custom_call.1} parent=1 // pred_check
      _
    $region55: #{tpu_custom_call.1} parent=1 // pred_check_branch
      %102 = sbr.rel (0) target = $region57
    $region56: #{tpu_custom_call.1} parent=1 // pred_region
      %103 = dma.done [#allocation6], 256
    $region57: #{tpu_custom_call.1} parent=1 // pred_fallthru
      _
    // Predicated region
    $region58: #{tpu_custom_call.1} parent=1 // pred_check
      _
    $region59: #{tpu_custom_call.1} parent=1 // pred_check_branch
      %105 = sbr.rel (0) target = $region61
    $region60: #{tpu_custom_call.1} parent=1 // pred_region
      %106 = dma.done [#allocation9], 256
    $region61: #{tpu_custom_call.1} parent=1 // pred_fallthru
      _
    // Predicated region
    $region62: #{tpu_custom_call.1} parent=1 // pred_check
      _
    $region63: #{tpu_custom_call.1} parent=1 // pred_check_branch
      %108 = sbr.rel (0) target = $region65
    $region64: #{tpu_custom_call.1} parent=1 // pred_region
      %109 = dma.done [#allocation9], 256
    $region65: #{tpu_custom_call.1} parent=1 // pred_fallthru
      _
    %v111 = vld [vmem:[#allocation2] sm:$0xf]
    %v112 = vld [vmem:[#allocation2 + $0x4] sm:$0xf]
    %v113 = vld [vmem:[#allocation7] sm:$0xf]
    %v114 = vld [vmem:[#allocation7 + $0x4] sm:$0xf]
    %v115 = vld [vmem:[#allocation7 + $0x8] sm:$0xf]
    %v116 = vld [vmem:[#allocation7 + $0xc] sm:$0xf]
    %v117 = vld [vmem:[#allocation10] sm:$0xf]
    %v118 = vld [vmem:[#allocation10 + $0x4] sm:$0xf]
    %v119 = vld [vmem:[#allocation10 + $0x8] sm:$0xf]
    %v120 = vld [vmem:[#allocation10 + $0xc] sm:$0xf]
    %v121 = vld [vmem:[%s3] sm:$0x1]
    %v122 = vld [vmem:[%s4] sm:$0x1]
    %v123 = vld [vmem:[%s5] sm:$0x1]
    %v124 = vld [vmem:[%s8] sm:$0x1]
    %v125 = vld [vmem:[%s9] sm:$0x1]
    %v126 = vld [vmem:[%s10] sm:$0x1]
    %v127 = vld [vmem:[#allocation5] sm:$0xf]
    %v128 = vld [vmem:[#allocation5 + $0x4] sm:$0xf]
    %v129 = vld [vmem:[#allocation5 + $0x8] sm:$0xf]
    %v130 = vld [vmem:[#allocation5 + $0xc] sm:$0xf]
    %v133 = vunpack.c.l.b16 %v111
    %v134 = vunpack.c.l.b16 %v112
    %v135 = vpack.c.b16 %v134, %v133
    %v140 = vunpack.c.l.b16 %v127
    %v141 = vunpack.c.l.b16 %v128
    %v142 = vunpack.c.l.b16 %v129
    %v143 = vunpack.c.l.b16 %v130
    %v144 = vpack.c.b16 %v141, %v140
    %v145 = vpack.c.b16 %v143, %v142
    %vm148 = vcmask 261120
    %v150 = vsel %vm148, %v135, 0
    %152 = vmatprep.subr.bf16.mxu0 0
    %153 = vmatpush1.bf16.msra.mxu0 0
    %154 = vmatprep.subr.bf16.mxu0 0
    %155 = vmatpush1.bf16.msra.mxu0 0
    %156 = vmatprep.subr.bf16.mxu0 0
    %157 = vmatpush1.bf16.msra.mxu0 0
    %158 = vmatprep.subr.bf16.mxu0 0
    %159 = vmatpush1.bf16.msra.mxu0 0
    %160 = vmatprep.subr.bf16.mxu0 0
    %161 = vmatpush1.bf16.msra.mxu0 0
    %162 = vmatprep.subr.bf16.mxu0 0
    %163 = vmatpush1.bf16.msra.mxu0 0
    %164 = vmatprep.subr.bf16.mxu0 0
    %165 = vmatpush1.bf16.msra.mxu0 %v145
    %166 = vmatprep.subr.bf16.mxu0 0
    %167 = vmatpush1.bf16.msra.mxu0 %v144
    %168 = vmatprep.subr.bf16.mxu0 0
    %169 = vmatpush2.bf16.msra.mxu0 0
    %170 = vmatprep.subr.bf16.mxu0 0
    %171 = vmatpush2.bf16.msra.mxu0 0
    %172 = vmatprep.subr.bf16.mxu0 0
    %173 = vmatpush2.bf16.msra.mxu0 0
    %174 = vmatprep.subr.bf16.mxu0 0
    %175 = vmatpush2.bf16.msra.mxu0 0
    %176 = vmatprep.subr.bf16.mxu0 0
    %177 = vmatpush2.bf16.msra.mxu0 0
    %178 = vmatprep.subr.bf16.mxu0 0
    %179 = vmatpush2.bf16.msra.mxu0 0
    %180 = vmatprep.subr.bf16.mxu0 0
    %181 = vmatpush2.bf16.msra.mxu0 0
    %182 = vmatprep.subr.bf16.mxu0 0
    %183 = vmatpush2.bf16.msra.mxu0 0
    %184 = vmatprep.mubr.bf16.mxu0 0
    %185 = vmatmul.mubr.bf16.gmra.mxu0 %v150
    %v186 = vpop.f32.mrf.mxu0
    %v187 = vadd.f32 0.0, %v186
    %v188 = vpop.f32.mrf.mxu0
    %v189 = vpop.f32.mrf.mxu0
    %v190 = vadd.f32 0.0, %v189
    %v191 = vpop.f32.mrf.mxu0
    %192 = vdwg.mxu0
    %v197 = vunpack.c.l.b16 %v113
    %v198 = vunpack.c.l.b16 %v114
    %v199 = vunpack.c.l.b16 %v115
    %v200 = vunpack.c.l.b16 %v116
    %v201 = vpack.c.b16 %v198, %v197
    %v202 = vpack.c.b16 %v200, %v199
    %v206 = vsel %vm148, 0, 0
    %208 = vmatprep.subr.bf16.mxu0 0
    %209 = vmatpush1.bf16.msra.mxu0 0
    %210 = vmatprep.subr.bf16.mxu0 0
    %211 = vmatpush1.bf16.msra.mxu0 0
    %212 = vmatprep.subr.bf16.mxu0 0
    %213 = vmatpush1.bf16.msra.mxu0 0
    %214 = vmatprep.subr.bf16.mxu0 0
    %215 = vmatpush1.bf16.msra.mxu0 0
    %216 = vmatprep.subr.bf16.mxu0 0
    %217 = vmatpush1.bf16.msra.mxu0 0
    %218 = vmatprep.subr.bf16.mxu0 0
    %219 = vmatpush1.bf16.msra.mxu0 0
    %220 = vmatprep.subr.bf16.mxu0 0
    %221 = vmatpush1.bf16.msra.mxu0 %v202
    %222 = vmatprep.subr.bf16.mxu0 0
    %223 = vmatpush1.bf16.msra.mxu0 %v201
    %224 = vmatprep.subr.bf16.mxu0 0
    %225 = vmatpush2.bf16.msra.mxu0 0
    %226 = vmatprep.subr.bf16.mxu0 0
    %227 = vmatpush2.bf16.msra.mxu0 0
    %228 = vmatprep.subr.bf16.mxu0 0
    %229 = vmatpush2.bf16.msra.mxu0 0
    %230 = vmatprep.subr.bf16.mxu0 0
    %231 = vmatpush2.bf16.msra.mxu0 0
    %232 = vmatprep.subr.bf16.mxu0 0
    %233 = vmatpush2.bf16.msra.mxu0 0
    %234 = vmatprep.subr.bf16.mxu0 0
    %235 = vmatpush2.bf16.msra.mxu0 0
    %236 = vmatprep.subr.bf16.mxu0 0
    %237 = vmatpush2.bf16.msra.mxu0 0
    %238 = vmatprep.subr.bf16.mxu0 0
    %239 = vmatpush2.bf16.msra.mxu0 0
    %240 = vmatprep.mubr.bf16.mxu0 0
    %241 = vmatmul.mubr.bf16.gmra.mxu0 %v206
    %v242 = vpop.f32.mrf.mxu0
    %v243 = vadd.f32 0.0, %v242
    %v244 = vpop.f32.mrf.mxu0
    %v245 = vpop.f32.mrf.mxu0
    %v246 = vpop.f32.mrf.mxu0
    %247 = vdwg.mxu0
    %v248 = vadd.f32 %v187, %v243
    %v250 = vlaneseq
    %v251 = vshrl.u32 %v250, 7
    %v252 = vsub.s32 0, %v251
    %v253 = vrot.slane %v121, %v252
    %v255 = vadd.f32 %v248, %v253
    %v256 = vxor.u32 %v255, 2147483648
    %v257 = vmul.f32 %v256, 1.442695
    %v258 = vpow.pop %v257
    %v259 = vadd.f32 %v258, 1.0
    %v260 = vrcp.pop %v259
    %v261 = vmul.f32 1.0, %v260
    %v263 = vlaneseq
    %v264 = vshrl.u32 %v263, 7
    %v265 = vsub.s32 0, %v264
    %v266 = vrot.slane %v122, %v265
    %267 = vrot.lane.b32.xlu0 %v266, 64
    %v268 = vpop.permute.xlu0 %267
    %v270 = vadd.f32 %v187, %v268
    %v272 = vlaneseq
    %v273 = vshrl.u32 %v272, 7
    %v274 = vsub.s32 0, %v273
    %v275 = vrot.slane %v123, %v274
    %276 = vrot.lane.b32.xlu0 %v275, 64
    %v277 = vpop.permute.xlu0 %276
    %v279 = vadd.f32 %v243, %v277
    %281 = vrot.lane.b32.xlu0 %v279, 64
    %v282 = vpop.permute.xlu0 %281
    %v284 = vmul.f32 %v261, %v282
    %286 = vrot.lane.b32.xlu0 %v284, 64
    %v287 = vpop.permute.xlu0 %286
    %v289 = vadd.f32 %v270, %v287
    %v290 = vtanh.pop %v289
    %v291 = vsub.f32 1.0, %v261
    %293 = vrot.lane.b32.xlu0 %v290, 96
    %v294 = vpop.permute.xlu0 %293
    %v296 = vmul.f32 %v291, %v294
    %v297 = vmul.f32 %v261, 0.0
    %v298 = vadd.f32 %v296, %v297
    %v299 = vpack.c.bf16 %v298, %v298
    %301 = vrot.lane.b32.xlu0 %v299, 96
    %v302 = vpop.permute.xlu0 %301
    %v304 = vsel %vm148, %v302, 0
    %306 = vmatprep.subr.bf16.mxu0 0
    %307 = vmatpush1.bf16.msra.mxu0 0
    %308 = vmatprep.subr.bf16.mxu0 0
    %309 = vmatpush1.bf16.msra.mxu0 0
    %310 = vmatprep.subr.bf16.mxu0 0
    %311 = vmatpush1.bf16.msra.mxu0 0
    %312 = vmatprep.subr.bf16.mxu0 0
    %313 = vmatpush1.bf16.msra.mxu0 0
    %314 = vmatprep.subr.bf16.mxu0 0
    %315 = vmatpush1.bf16.msra.mxu0 0
    %316 = vmatprep.subr.bf16.mxu0 0
    %317 = vmatpush1.bf16.msra.mxu0 0
    %318 = vmatprep.subr.bf16.mxu0 0
    %319 = vmatpush1.bf16.msra.mxu0 %v202
    %320 = vmatprep.subr.bf16.mxu0 0
    %321 = vmatpush1.bf16.msra.mxu0 %v201
    %322 = vmatprep.subr.bf16.mxu0 0
    %323 = vmatpush2.bf16.msra.mxu0 0
    %324 = vmatprep.subr.bf16.mxu0 0
    %325 = vmatpush2.bf16.msra.mxu0 0
    %326 = vmatprep.subr.bf16.mxu0 0
    %327 = vmatpush2.bf16.msra.mxu0 0
    %328 = vmatprep.subr.bf16.mxu0 0
    %329 = vmatpush2.bf16.msra.mxu0 0
    %330 = vmatprep.subr.bf16.mxu0 0
    %331 = vmatpush2.bf16.msra.mxu0 0
    %332 = vmatprep.subr.bf16.mxu0 0
    %333 = vmatpush2.bf16.msra.mxu0 0
    %334 = vmatprep.subr.bf16.mxu0 0
    %335 = vmatpush2.bf16.msra.mxu0 0
    %336 = vmatprep.subr.bf16.mxu0 0
    %337 = vmatpush2.bf16.msra.mxu0 0
    %338 = vmatprep.mubr.bf16.mxu0 0
    %339 = vmatmul.mubr.bf16.gmra.mxu0 %v304
    %v340 = vpop.f32.mrf.mxu0
    %v341 = vadd.f32 0.0, %v340
    %v342 = vpop.f32.mrf.mxu0
    %v343 = vpop.f32.mrf.mxu0
    %v344 = vpop.f32.mrf.mxu0
    %345 = vdwg.mxu0
    %v347 = vrot.slane %v341, 6
    %v349 = vadd.f32 %v187, %v347
    %v350 = vadd.f32 %v349, %v253
    %v351 = vxor.u32 %v350, 2147483648
    %v352 = vmul.f32 %v351, 1.442695
    %v353 = vpow.pop %v352
    %v354 = vadd.f32 %v353, 1.0
    %v355 = vrcp.pop %v354
    %v356 = vmul.f32 1.0, %v355
    %v357 = vadd.f32 %v341, %v277
    %v359 = vrot.slane %v357, 6
    %360 = vrot.lane.b32.xlu0 %v359, 64
    %v361 = vpop.permute.xlu0 %360
    %v363 = vmul.f32 %v356, %v361
    %365 = vrot.lane.b32.xlu0 %v363, 64
    %v366 = vpop.permute.xlu0 %365
    %v368 = vadd.f32 %v270, %v366
    %v369 = vtanh.pop %v368
    %v370 = vsub.f32 1.0, %v356
    %372 = vrot.lane.b32.xlu0 %v369, 96
    %v373 = vpop.permute.xlu0 %372
    %v375 = vmul.f32 %v370, %v373
    %v377 = vrot.slane %v298, 6
    %v379 = vmul.f32 %v356, %v377
    %v380 = vadd.f32 %v375, %v379
    %v381 = vpack.c.bf16 %v380, %v380
    %v383 = vrot.slane %v381, 1
    %384 = vrot.lane.b32.xlu0 %v383, 96
    %v385 = vpop.permute.xlu0 %384
    %v387 = vsel %vm148, %v385, 0
    %389 = vmatprep.subr.bf16.mxu0 0
    %390 = vmatpush1.bf16.msra.mxu0 0
    %391 = vmatprep.subr.bf16.mxu0 0
    %392 = vmatpush1.bf16.msra.mxu0 0
    %393 = vmatprep.subr.bf16.mxu0 0
    %394 = vmatpush1.bf16.msra.mxu0 0
    %395 = vmatprep.subr.bf16.mxu0 0
    %396 = vmatpush1.bf16.msra.mxu0 0
    %397 = vmatprep.subr.bf16.mxu0 0
    %398 = vmatpush1.bf16.msra.mxu0 0
    %399 = vmatprep.subr.bf16.mxu0 0
    %400 = vmatpush1.bf16.msra.mxu0 0
    %401 = vmatprep.subr.bf16.mxu0 0
    %402 = vmatpush1.bf16.msra.mxu0 %v202
    %403 = vmatprep.subr.bf16.mxu0 0
    %404 = vmatpush1.bf16.msra.mxu0 %v201
    %405 = vmatprep.subr.bf16.mxu0 0
    %406 = vmatpush2.bf16.msra.mxu0 0
    %407 = vmatprep.subr.bf16.mxu0 0
    %408 = vmatpush2.bf16.msra.mxu0 0
    %409 = vmatprep.subr.bf16.mxu0 0
    %410 = vmatpush2.bf16.msra.mxu0 0
    %411 = vmatprep.subr.bf16.mxu0 0
    %412 = vmatpush2.bf16.msra.mxu0 0
    %413 = vmatprep.subr.bf16.mxu0 0
    %414 = vmatpush2.bf16.msra.mxu0 0
    %415 = vmatprep.subr.bf16.mxu0 0
    %416 = vmatpush2.bf16.msra.mxu0 0
    %417 = vmatprep.subr.bf16.mxu0 0
    %418 = vmatpush2.bf16.msra.mxu0 0
    %419 = vmatprep.subr.bf16.mxu0 0
    %420 = vmatpush2.bf16.msra.mxu0 0
    %421 = vmatprep.mubr.bf16.mxu0 0
    %422 = vmatmul.mubr.bf16.gmra.mxu0 %v387
    %v423 = vpop.f32.mrf.mxu0
    %v424 = vadd.f32 0.0, %v423
    %v425 = vpop.f32.mrf.mxu0
    %v426 = vpop.f32.mrf.mxu0
    %v427 = vpop.f32.mrf.mxu0
    %428 = vdwg.mxu0
    %v430 = vrot.slane %v424, 4
    %v432 = vadd.f32 %v187, %v430
    %v433 = vadd.f32 %v432, %v253
    %v434 = vxor.u32 %v433, 2147483648
    %v435 = vmul.f32 %v434, 1.442695
    %v436 = vpow.pop %v435
    %v437 = vadd.f32 %v436, 1.0
    %v438 = vrcp.pop %v437
    %v439 = vmul.f32 1.0, %v438
    %v440 = vadd.f32 %v424, %v277
    %v442 = vrot.slane %v440, 4
    %443 = vrot.lane.b32.xlu0 %v442, 64
    %v444 = vpop.permute.xlu0 %443
    %v446 = vmul.f32 %v439, %v444
    %448 = vrot.lane.b32.xlu0 %v446, 64
    %v449 = vpop.permute.xlu0 %448
    %v451 = vadd.f32 %v270, %v449
    %v452 = vtanh.pop %v451
    %v453 = vsub.f32 1.0, %v439
    %455 = vrot.lane.b32.xlu0 %v452, 96
    %v456 = vpop.permute.xlu0 %455
    %v458 = vmul.f32 %v453, %v456
    %v460 = vrot.slane %v380, 6
    %v462 = vmul.f32 %v439, %v460
    %v463 = vadd.f32 %v458, %v462
    %v464 = vpack.c.bf16 %v463, %v463
    %v466 = vrot.slane %v464, 2
    %467 = vrot.lane.b32.xlu0 %v466, 96
    %v468 = vpop.permute.xlu0 %467
    %v470 = vsel %vm148, %v468, 0
    %472 = vmatprep.subr.bf16.mxu0 0
    %473 = vmatpush1.bf16.msra.mxu0 0
    %474 = vmatprep.subr.bf16.mxu0 0
    %475 = vmatpush1.bf16.msra.mxu0 0
    %476 = vmatprep.subr.bf16.mxu0 0
    %477 = vmatpush1.bf16.msra.mxu0 0
    %478 = vmatprep.subr.bf16.mxu0 0
    %479 = vmatpush1.bf16.msra.mxu0 0
    %480 = vmatprep.subr.bf16.mxu0 0
    %481 = vmatpush1.bf16.msra.mxu0 0
    %482 = vmatprep.subr.bf16.mxu0 0
    %483 = vmatpush1.bf16.msra.mxu0 0
    %484 = vmatprep.subr.bf16.mxu0 0
    %485 = vmatpush1.bf16.msra.mxu0 %v202
    %486 = vmatprep.subr.bf16.mxu0 0
    %487 = vmatpush1.bf16.msra.mxu0 %v201
    %488 = vmatprep.subr.bf16.mxu0 0
    %489 = vmatpush2.bf16.msra.mxu0 0
    %490 = vmatprep.subr.bf16.mxu0 0
    %491 = vmatpush2.bf16.msra.mxu0 0
    %492 = vmatprep.subr.bf16.mxu0 0
    %493 = vmatpush2.bf16.msra.mxu0 0
    %494 = vmatprep.subr.bf16.mxu0 0
    %495 = vmatpush2.bf16.msra.mxu0 0
    %496 = vmatprep.subr.bf16.mxu0 0
    %497 = vmatpush2.bf16.msra.mxu0 0
    %498 = vmatprep.subr.bf16.mxu0 0
    %499 = vmatpush2.bf16.msra.mxu0 0
    %500 = vmatprep.subr.bf16.mxu0 0
    %501 = vmatpush2.bf16.msra.mxu0 0
    %502 = vmatprep.subr.bf16.mxu0 0
    %503 = vmatpush2.bf16.msra.mxu0 0
    %504 = vmatprep.mubr.bf16.mxu0 0
    %505 = vmatmul.mubr.bf16.gmra.mxu0 %v470
    %v506 = vpop.f32.mrf.mxu0
    %v507 = vadd.f32 0.0, %v506
    %v508 = vpop.f32.mrf.mxu0
    %v509 = vpop.f32.mrf.mxu0
    %v510 = vpop.f32.mrf.mxu0
    %511 = vdwg.mxu0
    %v513 = vrot.slane %v507, 2
    %v515 = vadd.f32 %v187, %v513
    %v516 = vadd.f32 %v515, %v253
    %v517 = vxor.u32 %v516, 2147483648
    %v518 = vmul.f32 %v517, 1.442695
    %v519 = vpow.pop %v518
    %v520 = vadd.f32 %v519, 1.0
    %v521 = vrcp.pop %v520
    %v522 = vmul.f32 1.0, %v521
    %v523 = vadd.f32 %v507, %v277
    %v525 = vrot.slane %v523, 2
    %526 = vrot.lane.b32.xlu0 %v525, 64
    %v527 = vpop.permute.xlu0 %526
    %v529 = vmul.f32 %v522, %v527
    %531 = vrot.lane.b32.xlu0 %v529, 64
    %v532 = vpop.permute.xlu0 %531
    %v534 = vadd.f32 %v270, %v532
    %v535 = vtanh.pop %v534
    %v536 = vsub.f32 1.0, %v522
    %538 = vrot.lane.b32.xlu0 %v535, 96
    %v539 = vpop.permute.xlu0 %538
    %v541 = vmul.f32 %v536, %v539
    %v543 = vrot.slane %v463, 6
    %v545 = vmul.f32 %v522, %v543
    %v546 = vadd.f32 %v541, %v545
    %v547 = vpack.c.bf16 %v546, %v546
    %v549 = vrot.slane %v547, 3
    %550 = vrot.lane.b32.xlu0 %v549, 96
    %v551 = vpop.permute.xlu0 %550
    %v553 = vsel %vm148, %v551, 0
    %555 = vmatprep.subr.bf16.mxu0 0
    %556 = vmatpush1.bf16.msra.mxu0 0
    %557 = vmatprep.subr.bf16.mxu0 0
    %558 = vmatpush1.bf16.msra.mxu0 0
    %559 = vmatprep.subr.bf16.mxu0 0
    %560 = vmatpush1.bf16.msra.mxu0 0
    %561 = vmatprep.subr.bf16.mxu0 0
    %562 = vmatpush1.bf16.msra.mxu0 0
    %563 = vmatprep.subr.bf16.mxu0 0
    %564 = vmatpush1.bf16.msra.mxu0 0
    %565 = vmatprep.subr.bf16.mxu0 0
    %566 = vmatpush1.bf16.msra.mxu0 0
    %567 = vmatprep.subr.bf16.mxu0 0
    %568 = vmatpush1.bf16.msra.mxu0 %v202
    %569 = vmatprep.subr.bf16.mxu0 0
    %570 = vmatpush1.bf16.msra.mxu0 %v201
    %571 = vmatprep.subr.bf16.mxu0 0
    %572 = vmatpush2.bf16.msra.mxu0 0
    %573 = vmatprep.subr.bf16.mxu0 0
    %574 = vmatpush2.bf16.msra.mxu0 0
    %575 = vmatprep.subr.bf16.mxu0 0
    %576 = vmatpush2.bf16.msra.mxu0 0
    %577 = vmatprep.subr.bf16.mxu0 0
    %578 = vmatpush2.bf16.msra.mxu0 0
    %579 = vmatprep.subr.bf16.mxu0 0
    %580 = vmatpush2.bf16.msra.mxu0 0
    %581 = vmatprep.subr.bf16.mxu0 0
    %582 = vmatpush2.bf16.msra.mxu0 0
    %583 = vmatprep.subr.bf16.mxu0 0
    %584 = vmatpush2.bf16.msra.mxu0 0
    %585 = vmatprep.subr.bf16.mxu0 0
    %586 = vmatpush2.bf16.msra.mxu0 0
    %587 = vmatprep.mubr.bf16.mxu0 0
    %588 = vmatmul.mubr.bf16.gmra.mxu0 %v553
    %v589 = vpop.f32.mrf.mxu0
    %v590 = vadd.f32 0.0, %v589
    %v591 = vpop.f32.mrf.mxu0
    %v592 = vpop.f32.mrf.mxu0
    %v593 = vpop.f32.mrf.mxu0
    %594 = vdwg.mxu0
    %v595 = vadd.f32 %v190, %v590
    %v596 = vadd.f32 %v595, %v253
    %v597 = vxor.u32 %v596, 2147483648
    %v598 = vmul.f32 %v597, 1.442695
    %v599 = vpow.pop %v598
    %v600 = vadd.f32 %v599, 1.0
    %v601 = vrcp.pop %v600
    %v602 = vmul.f32 1.0, %v601
    %v603 = vadd.f32 %v190, %v268
    %v604 = vadd.f32 %v590, %v277
    %606 = vrot.lane.b32.xlu0 %v604, 64
    %v607 = vpop.permute.xlu0 %606
    %v609 = vmul.f32 %v602, %v607
    %611 = vrot.lane.b32.xlu0 %v609, 64
    %v612 = vpop.permute.xlu0 %611
    %v614 = vadd.f32 %v603, %v612
    %v615 = vtanh.pop %v614
    %v616 = vsub.f32 1.0, %v602
    %618 = vrot.lane.b32.xlu0 %v615, 96
    %v619 = vpop.permute.xlu0 %618
    %v621 = vmul.f32 %v616, %v619
    %v623 = vrot.slane %v546, 6
    %v625 = vmul.f32 %v602, %v623
    %v626 = vadd.f32 %v621, %v625
    %v627 = vpack.c.bf16 %v626, %v626
    %629 = vrot.lane.b32.xlu0 %v627, 96
    %v630 = vpop.permute.xlu0 %629
    %v632 = vsel %vm148, %v630, 0
    %634 = vmatprep.subr.bf16.mxu0 0
    %635 = vmatpush1.bf16.msra.mxu0 0
    %636 = vmatprep.subr.bf16.mxu0 0
    %637 = vmatpush1.bf16.msra.mxu0 0
    %638 = vmatprep.subr.bf16.mxu0 0
    %639 = vmatpush1.bf16.msra.mxu0 0
    %640 = vmatprep.subr.bf16.mxu0 0
    %641 = vmatpush1.bf16.msra.mxu0 0
    %642 = vmatprep.subr.bf16.mxu0 0
    %643 = vmatpush1.bf16.msra.mxu0 0
    %644 = vmatprep.subr.bf16.mxu0 0
    %645 = vmatpush1.bf16.msra.mxu0 0
    %646 = vmatprep.subr.bf16.mxu0 0
    %647 = vmatpush1.bf16.msra.mxu0 %v202
    %648 = vmatprep.subr.bf16.mxu0 0
    %649 = vmatpush1.bf16.msra.mxu0 %v201
    %650 = vmatprep.subr.bf16.mxu0 0
    %651 = vmatpush2.bf16.msra.mxu0 0
    %652 = vmatprep.subr.bf16.mxu0 0
    %653 = vmatpush2.bf16.msra.mxu0 0
    %654 = vmatprep.subr.bf16.mxu0 0
    %655 = vmatpush2.bf16.msra.mxu0 0
    %656 = vmatprep.subr.bf16.mxu0 0
    %657 = vmatpush2.bf16.msra.mxu0 0
    %658 = vmatprep.subr.bf16.mxu0 0
    %659 = vmatpush2.bf16.msra.mxu0 0
    %660 = vmatprep.subr.bf16.mxu0 0
    %661 = vmatpush2.bf16.msra.mxu0 0
    %662 = vmatprep.subr.bf16.mxu0 0
    %663 = vmatpush2.bf16.msra.mxu0 0
    %664 = vmatprep.subr.bf16.mxu0 0
    %665 = vmatpush2.bf16.msra.mxu0 0
    %666 = vmatprep.mubr.bf16.mxu0 0
    %667 = vmatmul.mubr.bf16.gmra.mxu0 %v632
    %v668 = vpop.f32.mrf.mxu0
    %v669 = vadd.f32 0.0, %v668
    %v670 = vpop.f32.mrf.mxu0
    %v671 = vpop.f32.mrf.mxu0
    %v672 = vpop.f32.mrf.mxu0
    %673 = vdwg.mxu0
    %v675 = vrot.slane %v669, 6
    %v677 = vadd.f32 %v190, %v675
    %v678 = vadd.f32 %v677, %v253
    %v679 = vxor.u32 %v678, 2147483648
    %v680 = vmul.f32 %v679, 1.442695
    %v681 = vpow.pop %v680
    %v682 = vadd.f32 %v681, 1.0
    %v683 = vrcp.pop %v682
    %v684 = vmul.f32 1.0, %v683
    %v685 = vadd.f32 %v669, %v277
    %v687 = vrot.slane %v685, 6
    %688 = vrot.lane.b32.xlu0 %v687, 64
    %v689 = vpop.permute.xlu0 %688
    %v691 = vmul.f32 %v684, %v689
    %693 = vrot.lane.b32.xlu0 %v691, 64
    %v694 = vpop.permute.xlu0 %693
    %v696 = vadd.f32 %v603, %v694
    %v697 = vtanh.pop %v696
    %v698 = vsub.f32 1.0, %v684
    %700 = vrot.lane.b32.xlu0 %v697, 96
    %v701 = vpop.permute.xlu0 %700
    %v703 = vmul.f32 %v698, %v701
    %v705 = vrot.slane %v626, 6
    %v707 = vmul.f32 %v684, %v705
    %v708 = vadd.f32 %v703, %v707
    %v709 = vpack.c.bf16 %v708, %v708
    %v711 = vrot.slane %v709, 1
    %712 = vrot.lane.b32.xlu0 %v711, 96
    %v713 = vpop.permute.xlu0 %712
    %v715 = vsel %vm148, %v713, 0
    %717 = vmatprep.subr.bf16.mxu0 0
    %718 = vmatpush1.bf16.msra.mxu0 0
    %719 = vmatprep.subr.bf16.mxu0 0
    %720 = vmatpush1.bf16.msra.mxu0 0
    %721 = vmatprep.subr.bf16.mxu0 0
    %722 = vmatpush1.bf16.msra.mxu0 0
    %723 = vmatprep.subr.bf16.mxu0 0
    %724 = vmatpush1.bf16.msra.mxu0 0
    %725 = vmatprep.subr.bf16.mxu0 0
    %726 = vmatpush1.bf16.msra.mxu0 0
    %727 = vmatprep.subr.bf16.mxu0 0
    %728 = vmatpush1.bf16.msra.mxu0 0
    %729 = vmatprep.subr.bf16.mxu0 0
    %730 = vmatpush1.bf16.msra.mxu0 %v202
    %731 = vmatprep.subr.bf16.mxu0 0
    %732 = vmatpush1.bf16.msra.mxu0 %v201
    %733 = vmatprep.subr.bf16.mxu0 0
    %734 = vmatpush2.bf16.msra.mxu0 0
    %735 = vmatprep.subr.bf16.mxu0 0
    %736 = vmatpush2.bf16.msra.mxu0 0
    %737 = vmatprep.subr.bf16.mxu0 0
    %738 = vmatpush2.bf16.msra.mxu0 0
    %739 = vmatprep.subr.bf16.mxu0 0
    %740 = vmatpush2.bf16.msra.mxu0 0
    %741 = vmatprep.subr.bf16.mxu0 0
    %742 = vmatpush2.bf16.msra.mxu0 0
    %743 = vmatprep.subr.bf16.mxu0 0
    %744 = vmatpush2.bf16.msra.mxu0 0
    %745 = vmatprep.subr.bf16.mxu0 0
    %746 = vmatpush2.bf16.msra.mxu0 0
    %747 = vmatprep.subr.bf16.mxu0 0
    %748 = vmatpush2.bf16.msra.mxu0 0
    %749 = vmatprep.mubr.bf16.mxu0 0
    %750 = vmatmul.mubr.bf16.gmra.mxu0 %v715
    %v751 = vpop.f32.mrf.mxu0
    %v752 = vadd.f32 0.0, %v751
    %v753 = vpop.f32.mrf.mxu0
    %v754 = vpop.f32.mrf.mxu0
    %v755 = vpop.f32.mrf.mxu0
    %756 = vdwg.mxu0
    %v758 = vrot.slane %v752, 4
    %v760 = vadd.f32 %v190, %v758
    %v761 = vadd.f32 %v760, %v253
    %v762 = vxor.u32 %v761, 2147483648
    %v763 = vmul.f32 %v762, 1.442695
    %v764 = vpow.pop %v763
    %v765 = vadd.f32 %v764, 1.0
    %v766 = vrcp.pop %v765
    %v767 = vmul.f32 1.0, %v766
    %v768 = vadd.f32 %v752, %v277
    %v770 = vrot.slane %v768, 4
    %771 = vrot.lane.b32.xlu0 %v770, 64
    %v772 = vpop.permute.xlu0 %771
    %v774 = vmul.f32 %v767, %v772
    %776 = vrot.lane.b32.xlu0 %v774, 64
    %v777 = vpop.permute.xlu0 %776
    %v779 = vadd.f32 %v603, %v777
    %v780 = vtanh.pop %v779
    %v781 = vsub.f32 1.0, %v767
    %783 = vrot.lane.b32.xlu0 %v780, 96
    %v784 = vpop.permute.xlu0 %783
    %v786 = vmul.f32 %v781, %v784
    %v788 = vrot.slane %v708, 6
    %v790 = vmul.f32 %v767, %v788
    %v791 = vadd.f32 %v786, %v790
    %v792 = vpack.c.bf16 %v791, %v791
    %v794 = vrot.slane %v792, 2
    %795 = vrot.lane.b32.xlu0 %v794, 96
    %v796 = vpop.permute.xlu0 %795
    %v798 = vsel %vm148, %v796, 0
    %800 = vmatprep.subr.bf16.mxu0 0
    %801 = vmatpush1.bf16.msra.mxu0 0
    %802 = vmatprep.subr.bf16.mxu0 0
    %803 = vmatpush1.bf16.msra.mxu0 0
    %804 = vmatprep.subr.bf16.mxu0 0
    %805 = vmatpush1.bf16.msra.mxu0 0
    %806 = vmatprep.subr.bf16.mxu0 0
    %807 = vmatpush1.bf16.msra.mxu0 0
    %808 = vmatprep.subr.bf16.mxu0 0
    %809 = vmatpush1.bf16.msra.mxu0 0
    %810 = vmatprep.subr.bf16.mxu0 0
    %811 = vmatpush1.bf16.msra.mxu0 0
    %812 = vmatprep.subr.bf16.mxu0 0
    %813 = vmatpush1.bf16.msra.mxu0 %v202
    %814 = vmatprep.subr.bf16.mxu0 0
    %815 = vmatpush1.bf16.msra.mxu0 %v201
    %816 = vmatprep.subr.bf16.mxu0 0
    %817 = vmatpush2.bf16.msra.mxu0 0
    %818 = vmatprep.subr.bf16.mxu0 0
    %819 = vmatpush2.bf16.msra.mxu0 0
    %820 = vmatprep.subr.bf16.mxu0 0
    %821 = vmatpush2.bf16.msra.mxu0 0
    %822 = vmatprep.subr.bf16.mxu0 0
    %823 = vmatpush2.bf16.msra.mxu0 0
    %824 = vmatprep.subr.bf16.mxu0 0
    %825 = vmatpush2.bf16.msra.mxu0 0
    %826 = vmatprep.subr.bf16.mxu0 0
    %827 = vmatpush2.bf16.msra.mxu0 0
    %828 = vmatprep.subr.bf16.mxu0 0
    %829 = vmatpush2.bf16.msra.mxu0 0
    %830 = vmatprep.subr.bf16.mxu0 0
    %831 = vmatpush2.bf16.msra.mxu0 0
    %832 = vmatprep.mubr.bf16.mxu0 0
    %833 = vmatmul.mubr.bf16.gmra.mxu0 %v798
    %v834 = vpop.f32.mrf.mxu0
    %v835 = vadd.f32 0.0, %v834
    %v836 = vpop.f32.mrf.mxu0
    %v837 = vpop.f32.mrf.mxu0
    %v838 = vpop.f32.mrf.mxu0
    %839 = vdwg.mxu0
    %v841 = vrot.slane %v835, 2
    %v843 = vadd.f32 %v190, %v841
    %v844 = vadd.f32 %v843, %v253
    %v845 = vxor.u32 %v844, 2147483648
    %v846 = vmul.f32 %v845, 1.442695
    %v847 = vpow.pop %v846
    %v848 = vadd.f32 %v847, 1.0
    %v849 = vrcp.pop %v848
    %v850 = vmul.f32 1.0, %v849
    %v851 = vadd.f32 %v835, %v277
    %v853 = vrot.slane %v851, 2
    %854 = vrot.lane.b32.xlu0 %v853, 64
    %v855 = vpop.permute.xlu0 %854
    %v857 = vmul.f32 %v850, %v855
    %859 = vrot.lane.b32.xlu0 %v857, 64
    %v860 = vpop.permute.xlu0 %859
    %v862 = vadd.f32 %v603, %v860
    %v863 = vtanh.pop %v862
    %v864 = vsub.f32 1.0, %v850
    %866 = vrot.lane.b32.xlu0 %v863, 96
    %v867 = vpop.permute.xlu0 %866
    %v869 = vmul.f32 %v864, %v867
    %v871 = vrot.slane %v791, 6
    %v873 = vmul.f32 %v850, %v871
    %v874 = vadd.f32 %v869, %v873
    %vm875 = vcmask 1041408
    %v876 = vsel %vm875, %v298, %v380
    %vm877 = vcmask 1043456
    %v878 = vsel %vm877, %v876, %v463
    %vm879 = vcmask 1045504
    %v880 = vsel %vm879, %v878, %v546
    %v881 = vsel %vm875, %v626, %v708
    %v882 = vsel %vm877, %v881, %v791
    %v883 = vsel %vm879, %v882, %v874
    %v884 = vpack.c.bf16 %v883, %v880
    %v885 = vld [vmem:[#allocation8] sm:$0xf]
    %v886 = vld [vmem:[#allocation8 + $0x4] sm:$0xf]
    %v887 = vld [vmem:[#allocation8 + $0x8] sm:$0xf]
    %v888 = vld [vmem:[#allocation8 + $0xc] sm:$0xf]
    %890 = vrot.lane.b32.xlu0 %v884, 96
    %v891 = vpop.permute.xlu0 %890
    %v896 = vunpack.c.l.b16 %v885
    %v897 = vunpack.c.l.b16 %v886
    %v898 = vunpack.c.l.b16 %v887
    %v899 = vunpack.c.l.b16 %v888
    %v900 = vpack.c.b16 %v897, %v896
    %v901 = vpack.c.b16 %v899, %v898
    %v905 = vsel %vm148, %v891, 0
    %907 = vmatprep.subr.bf16.mxu0 0
    %908 = vmatpush1.bf16.msra.mxu0 0
    %909 = vmatprep.subr.bf16.mxu0 0
    %910 = vmatpush1.bf16.msra.mxu0 0
    %911 = vmatprep.subr.bf16.mxu0 0
    %912 = vmatpush1.bf16.msra.mxu0 0
    %913 = vmatprep.subr.bf16.mxu0 0
    %914 = vmatpush1.bf16.msra.mxu0 0
    %915 = vmatprep.subr.bf16.mxu0 0
    %916 = vmatpush1.bf16.msra.mxu0 0
    %917 = vmatprep.subr.bf16.mxu0 0
    %918 = vmatpush1.bf16.msra.mxu0 0
    %919 = vmatprep.subr.bf16.mxu0 0
    %920 = vmatpush1.bf16.msra.mxu0 %v901
    %921 = vmatprep.subr.bf16.mxu0 0
    %922 = vmatpush1.bf16.msra.mxu0 %v900
    %923 = vmatprep.subr.bf16.mxu0 0
    %924 = vmatpush2.bf16.msra.mxu0 0
    %925 = vmatprep.subr.bf16.mxu0 0
    %926 = vmatpush2.bf16.msra.mxu0 0
    %927 = vmatprep.subr.bf16.mxu0 0
    %928 = vmatpush2.bf16.msra.mxu0 0
    %929 = vmatprep.subr.bf16.mxu0 0
    %930 = vmatpush2.bf16.msra.mxu0 0
    %931 = vmatprep.subr.bf16.mxu0 0
    %932 = vmatpush2.bf16.msra.mxu0 0
    %933 = vmatprep.subr.bf16.mxu0 0
    %934 = vmatpush2.bf16.msra.mxu0 0
    %935 = vmatprep.subr.bf16.mxu0 0
    %936 = vmatpush2.bf16.msra.mxu0 0
    %937 = vmatprep.subr.bf16.mxu0 0
    %938 = vmatpush2.bf16.msra.mxu0 0
    %939 = vmatprep.mubr.bf16.mxu0 0
    %940 = vmatmul.mubr.bf16.gmra.mxu0 %v905
    %v941 = vpop.f32.mrf.mxu0
    %v942 = vadd.f32 0.0, %v941
    %v943 = vpop.f32.mrf.mxu0
    %v944 = vpop.f32.mrf.mxu0
    %v945 = vadd.f32 0.0, %v944
    %v946 = vpop.f32.mrf.mxu0
    %947 = vdwg.mxu0
    %v952 = vunpack.c.l.b16 %v117
    %v953 = vunpack.c.l.b16 %v118
    %v954 = vunpack.c.l.b16 %v119
    %v955 = vunpack.c.l.b16 %v120
    %v956 = vpack.c.b16 %v953, %v952
    %v957 = vpack.c.b16 %v955, %v954
    %960 = vmatprep.subr.bf16.mxu0 0
    %961 = vmatpush1.bf16.msra.mxu0 0
    %962 = vmatprep.subr.bf16.mxu0 0
    %963 = vmatpush1.bf16.msra.mxu0 0
    %964 = vmatprep.subr.bf16.mxu0 0
    %965 = vmatpush1.bf16.msra.mxu0 0
    %966 = vmatprep.subr.bf16.mxu0 0
    %967 = vmatpush1.bf16.msra.mxu0 0
    %968 = vmatprep.subr.bf16.mxu0 0
    %969 = vmatpush1.bf16.msra.mxu0 0
    %970 = vmatprep.subr.bf16.mxu0 0
    %971 = vmatpush1.bf16.msra.mxu0 0
    %972 = vmatprep.subr.bf16.mxu0 0
    %973 = vmatpush1.bf16.msra.mxu0 %v957
    %974 = vmatprep.subr.bf16.mxu0 0
    %975 = vmatpush1.bf16.msra.mxu0 %v956
    %976 = vmatprep.subr.bf16.mxu0 0
    %977 = vmatpush2.bf16.msra.mxu0 0
    %978 = vmatprep.subr.bf16.mxu0 0
    %979 = vmatpush2.bf16.msra.mxu0 0
    %980 = vmatprep.subr.bf16.mxu0 0
    %981 = vmatpush2.bf16.msra.mxu0 0
    %982 = vmatprep.subr.bf16.mxu0 0
    %983 = vmatpush2.bf16.msra.mxu0 0
    %984 = vmatprep.subr.bf16.mxu0 0
    %985 = vmatpush2.bf16.msra.mxu0 0
    %986 = vmatprep.subr.bf16.mxu0 0
    %987 = vmatpush2.bf16.msra.mxu0 0
    %988 = vmatprep.subr.bf16.mxu0 0
    %989 = vmatpush2.bf16.msra.mxu0 0
    %990 = vmatprep.subr.bf16.mxu0 0
    %991 = vmatpush2.bf16.msra.mxu0 0
    %992 = vmatprep.mubr.bf16.mxu0 0
    %993 = vmatmul.mubr.bf16.gmra.mxu0 %v206
    %v994 = vpop.f32.mrf.mxu0
    %v995 = vadd.f32 0.0, %v994
    %v996 = vpop.f32.mrf.mxu0
    %v997 = vpop.f32.mrf.mxu0
    %v998 = vpop.f32.mrf.mxu0
    %999 = vdwg.mxu0
    %v1000 = vadd.f32 %v942, %v995
    %v1002 = vlaneseq
    %v1003 = vshrl.u32 %v1002, 7
    %v1004 = vsub.s32 0, %v1003
    %v1005 = vrot.slane %v124, %v1004
    %v1007 = vadd.f32 %v1000, %v1005
    %v1008 = vxor.u32 %v1007, 2147483648
    %v1009 = vmul.f32 %v1008, 1.442695
    %v1010 = vpow.pop %v1009
    %v1011 = vadd.f32 %v1010, 1.0
    %v1012 = vrcp.pop %v1011
    %v1013 = vmul.f32 1.0, %v1012
    %v1015 = vlaneseq
    %v1016 = vshrl.u32 %v1015, 7
    %v1017 = vsub.s32 0, %v1016
    %v1018 = vrot.slane %v125, %v1017
    %1019 = vrot.lane.b32.xlu0 %v1018, 64
    %v1020 = vpop.permute.xlu0 %1019
    %v1022 = vadd.f32 %v942, %v1020
    %v1024 = vlaneseq
    %v1025 = vshrl.u32 %v1024, 7
    %v1026 = vsub.s32 0, %v1025
    %v1027 = vrot.slane %v126, %v1026
    %1028 = vrot.lane.b32.xlu0 %v1027, 64
    %v1029 = vpop.permute.xlu0 %1028
    %v1031 = vadd.f32 %v995, %v1029
    %1033 = vrot.lane.b32.xlu0 %v1031, 64
    %v1034 = vpop.permute.xlu0 %1033
    %v1036 = vmul.f32 %v1013, %v1034
    %1038 = vrot.lane.b32.xlu0 %v1036, 64
    %v1039 = vpop.permute.xlu0 %1038
    %v1041 = vadd.f32 %v1022, %v1039
    %v1042 = vtanh.pop %v1041
    %v1043 = vsub.f32 1.0, %v1013
    %1045 = vrot.lane.b32.xlu0 %v1042, 96
    %v1046 = vpop.permute.xlu0 %1045
    %v1048 = vmul.f32 %v1043, %v1046
    %v1049 = vmul.f32 %v1013, 0.0
    %v1050 = vadd.f32 %v1048, %v1049
    %v1051 = vpack.c.bf16 %v1050, %v1050
    %1053 = vrot.lane.b32.xlu0 %v1051, 96
    %v1054 = vpop.permute.xlu0 %1053
    %v1056 = vsel %vm148, %v1054, 0
    %1058 = vmatprep.subr.bf16.mxu0 0
    %1059 = vmatpush1.bf16.msra.mxu0 0
    %1060 = vmatprep.subr.bf16.mxu0 0
    %1061 = vmatpush1.bf16.msra.mxu0 0
    %1062 = vmatprep.subr.bf16.mxu0 0
    %1063 = vmatpush1.bf16.msra.mxu0 0
    %1064 = vmatprep.subr.bf16.mxu0 0
    %1065 = vmatpush1.bf16.msra.mxu0 0
    %1066 = vmatprep.subr.bf16.mxu0 0
    %1067 = vmatpush1.bf16.msra.mxu0 0
    %1068 = vmatprep.subr.bf16.mxu0 0
    %1069 = vmatpush1.bf16.msra.mxu0 0
    %1070 = vmatprep.subr.bf16.mxu0 0
    %1071 = vmatpush1.bf16.msra.mxu0 %v957
    %1072 = vmatprep.subr.bf16.mxu0 0
    %1073 = vmatpush1.bf16.msra.mxu0 %v956
    %1074 = vmatprep.subr.bf16.mxu0 0
    %1075 = vmatpush2.bf16.msra.mxu0 0
    %1076 = vmatprep.subr.bf16.mxu0 0
    %1077 = vmatpush2.bf16.msra.mxu0 0
    %1078 = vmatprep.subr.bf16.mxu0 0
    %1079 = vmatpush2.bf16.msra.mxu0 0
    %1080 = vmatprep.subr.bf16.mxu0 0
    %1081 = vmatpush2.bf16.msra.mxu0 0
    %1082 = vmatprep.subr.bf16.mxu0 0
    %1083 = vmatpush2.bf16.msra.mxu0 0
    %1084 = vmatprep.subr.bf16.mxu0 0
    %1085 = vmatpush2.bf16.msra.mxu0 0
    %1086 = vmatprep.subr.bf16.mxu0 0
    %1087 = vmatpush2.bf16.msra.mxu0 0
    %1088 = vmatprep.subr.bf16.mxu0 0
    %1089 = vmatpush2.bf16.msra.mxu0 0
    %1090 = vmatprep.mubr.bf16.mxu0 0
    %1091 = vmatmul.mubr.bf16.gmra.mxu0 %v1056
    %v1092 = vpop.f32.mrf.mxu0
    %v1093 = vadd.f32 0.0, %v1092
    %v1094 = vpop.f32.mrf.mxu0
    %v1095 = vpop.f32.mrf.mxu0
    %v1096 = vpop.f32.mrf.mxu0
    %1097 = vdwg.mxu0
    %v1099 = vrot.slane %v1093, 6
    %v1101 = vadd.f32 %v942, %v1099
    %v1102 = vadd.f32 %v1101, %v1005
    %v1103 = vxor.u32 %v1102, 2147483648
    %v1104 = vmul.f32 %v1103, 1.442695
    %v1105 = vpow.pop %v1104
    %v1106 = vadd.f32 %v1105, 1.0
    %v1107 = vrcp.pop %v1106
    %v1108 = vmul.f32 1.0, %v1107
    %v1109 = vadd.f32 %v1093, %v1029
    %v1111 = vrot.slane %v1109, 6
    %1112 = vrot.lane.b32.xlu0 %v1111, 64
    %v1113 = vpop.permute.xlu0 %1112
    %v1115 = vmul.f32 %v1108, %v1113
    %1117 = vrot.lane.b32.xlu0 %v1115, 64
    %v1118 = vpop.permute.xlu0 %1117
    %v1120 = vadd.f32 %v1022, %v1118
    %v1121 = vtanh.pop %v1120
    %v1122 = vsub.f32 1.0, %v1108
    %1124 = vrot.lane.b32.xlu0 %v1121, 96
    %v1125 = vpop.permute.xlu0 %1124
    %v1127 = vmul.f32 %v1122, %v1125
    %v1129 = vrot.slane %v1050, 6
    %v1131 = vmul.f32 %v1108, %v1129
    %v1132 = vadd.f32 %v1127, %v1131
    %v1133 = vpack.c.bf16 %v1132, %v1132
    %v1135 = vrot.slane %v1133, 1
    %1136 = vrot.lane.b32.xlu0 %v1135, 96
    %v1137 = vpop.permute.xlu0 %1136
    %v1139 = vsel %vm148, %v1137, 0
    %1141 = vmatprep.subr.bf16.mxu0 0
    %1142 = vmatpush1.bf16.msra.mxu0 0
    %1143 = vmatprep.subr.bf16.mxu0 0
    %1144 = vmatpush1.bf16.msra.mxu0 0
    %1145 = vmatprep.subr.bf16.mxu0 0
    %1146 = vmatpush1.bf16.msra.mxu0 0
    %1147 = vmatprep.subr.bf16.mxu0 0
    %1148 = vmatpush1.bf16.msra.mxu0 0
    %1149 = vmatprep.subr.bf16.mxu0 0
    %1150 = vmatpush1.bf16.msra.mxu0 0
    %1151 = vmatprep.subr.bf16.mxu0 0
    %1152 = vmatpush1.bf16.msra.mxu0 0
    %1153 = vmatprep.subr.bf16.mxu0 0
    %1154 = vmatpush1.bf16.msra.mxu0 %v957
    %1155 = vmatprep.subr.bf16.mxu0 0
    %1156 = vmatpush1.bf16.msra.mxu0 %v956
    %1157 = vmatprep.subr.bf16.mxu0 0
    %1158 = vmatpush2.bf16.msra.mxu0 0
    %1159 = vmatprep.subr.bf16.mxu0 0
    %1160 = vmatpush2.bf16.msra.mxu0 0
    %1161 = vmatprep.subr.bf16.mxu0 0
    %1162 = vmatpush2.bf16.msra.mxu0 0
    %1163 = vmatprep.subr.bf16.mxu0 0
    %1164 = vmatpush2.bf16.msra.mxu0 0
    %1165 = vmatprep.subr.bf16.mxu0 0
    %1166 = vmatpush2.bf16.msra.mxu0 0
    %1167 = vmatprep.subr.bf16.mxu0 0
    %1168 = vmatpush2.bf16.msra.mxu0 0
    %1169 = vmatprep.subr.bf16.mxu0 0
    %1170 = vmatpush2.bf16.msra.mxu0 0
    %1171 = vmatprep.subr.bf16.mxu0 0
    %1172 = vmatpush2.bf16.msra.mxu0 0
    %1173 = vmatprep.mubr.bf16.mxu0 0
    %1174 = vmatmul.mubr.bf16.gmra.mxu0 %v1139
    %v1175 = vpop.f32.mrf.mxu0
    %v1176 = vadd.f32 0.0, %v1175
    %v1177 = vpop.f32.mrf.mxu0
    %v1178 = vpop.f32.mrf.mxu0
    %v1179 = vpop.f32.mrf.mxu0
    %1180 = vdwg.mxu0
    %v1182 = vrot.slane %v1176, 4
    %v1184 = vadd.f32 %v942, %v1182
    %v1185 = vadd.f32 %v1184, %v1005
    %v1186 = vxor.u32 %v1185, 2147483648
    %v1187 = vmul.f32 %v1186, 1.442695
    %v1188 = vpow.pop %v1187
    %v1189 = vadd.f32 %v1188, 1.0
    %v1190 = vrcp.pop %v1189
    %v1191 = vmul.f32 1.0, %v1190
    %v1192 = vadd.f32 %v1176, %v1029
    %v1194 = vrot.slane %v1192, 4
    %1195 = vrot.lane.b32.xlu0 %v1194, 64
    %v1196 = vpop.permute.xlu0 %1195
    %v1198 = vmul.f32 %v1191, %v1196
    %1200 = vrot.lane.b32.xlu0 %v1198, 64
    %v1201 = vpop.permute.xlu0 %1200
    %v1203 = vadd.f32 %v1022, %v1201
    %v1204 = vtanh.pop %v1203
    %v1205 = vsub.f32 1.0, %v1191
    %1207 = vrot.lane.b32.xlu0 %v1204, 96
    %v1208 = vpop.permute.xlu0 %1207
    %v1210 = vmul.f32 %v1205, %v1208
    %v1212 = vrot.slane %v1132, 6
    %v1214 = vmul.f32 %v1191, %v1212
    %v1215 = vadd.f32 %v1210, %v1214
    %v1216 = vpack.c.bf16 %v1215, %v1215
    %v1218 = vrot.slane %v1216, 2
    %1219 = vrot.lane.b32.xlu0 %v1218, 96
    %v1220 = vpop.permute.xlu0 %1219
    %v1222 = vsel %vm148, %v1220, 0
    %1224 = vmatprep.subr.bf16.mxu0 0
    %1225 = vmatpush1.bf16.msra.mxu0 0
    %1226 = vmatprep.subr.bf16.mxu0 0
    %1227 = vmatpush1.bf16.msra.mxu0 0
    %1228 = vmatprep.subr.bf16.mxu0 0
    %1229 = vmatpush1.bf16.msra.mxu0 0
    %1230 = vmatprep.subr.bf16.mxu0 0
    %1231 = vmatpush1.bf16.msra.mxu0 0
    %1232 = vmatprep.subr.bf16.mxu0 0
    %1233 = vmatpush1.bf16.msra.mxu0 0
    %1234 = vmatprep.subr.bf16.mxu0 0
    %1235 = vmatpush1.bf16.msra.mxu0 0
    %1236 = vmatprep.subr.bf16.mxu0 0
    %1237 = vmatpush1.bf16.msra.mxu0 %v957
    %1238 = vmatprep.subr.bf16.mxu0 0
    %1239 = vmatpush1.bf16.msra.mxu0 %v956
    %1240 = vmatprep.subr.bf16.mxu0 0
    %1241 = vmatpush2.bf16.msra.mxu0 0
    %1242 = vmatprep.subr.bf16.mxu0 0
    %1243 = vmatpush2.bf16.msra.mxu0 0
    %1244 = vmatprep.subr.bf16.mxu0 0
    %1245 = vmatpush2.bf16.msra.mxu0 0
    %1246 = vmatprep.subr.bf16.mxu0 0
    %1247 = vmatpush2.bf16.msra.mxu0 0
    %1248 = vmatprep.subr.bf16.mxu0 0
    %1249 = vmatpush2.bf16.msra.mxu0 0
    %1250 = vmatprep.subr.bf16.mxu0 0
    %1251 = vmatpush2.bf16.msra.mxu0 0
    %1252 = vmatprep.subr.bf16.mxu0 0
    %1253 = vmatpush2.bf16.msra.mxu0 0
    %1254 = vmatprep.subr.bf16.mxu0 0
    %1255 = vmatpush2.bf16.msra.mxu0 0
    %1256 = vmatprep.mubr.bf16.mxu0 0
    %1257 = vmatmul.mubr.bf16.gmra.mxu0 %v1222
    %v1258 = vpop.f32.mrf.mxu0
    %v1259 = vadd.f32 0.0, %v1258
    %v1260 = vpop.f32.mrf.mxu0
    %v1261 = vpop.f32.mrf.mxu0
    %v1262 = vpop.f32.mrf.mxu0
    %1263 = vdwg.mxu0
    %v1265 = vrot.slane %v1259, 2
    %v1267 = vadd.f32 %v942, %v1265
    %v1268 = vadd.f32 %v1267, %v1005
    %v1269 = vxor.u32 %v1268, 2147483648
    %v1270 = vmul.f32 %v1269, 1.442695
    %v1271 = vpow.pop %v1270
    %v1272 = vadd.f32 %v1271, 1.0
    %v1273 = vrcp.pop %v1272
    %v1274 = vmul.f32 1.0, %v1273
    %v1275 = vadd.f32 %v1259, %v1029
    %v1277 = vrot.slane %v1275, 2
    %1278 = vrot.lane.b32.xlu0 %v1277, 64
    %v1279 = vpop.permute.xlu0 %1278
    %v1281 = vmul.f32 %v1274, %v1279
    %1283 = vrot.lane.b32.xlu0 %v1281, 64
    %v1284 = vpop.permute.xlu0 %1283
    %v1286 = vadd.f32 %v1022, %v1284
    %v1287 = vtanh.pop %v1286
    %v1288 = vsub.f32 1.0, %v1274
    %1290 = vrot.lane.b32.xlu0 %v1287, 96
    %v1291 = vpop.permute.xlu0 %1290
    %v1293 = vmul.f32 %v1288, %v1291
    %v1295 = vrot.slane %v1215, 6
    %v1297 = vmul.f32 %v1274, %v1295
    %v1298 = vadd.f32 %v1293, %v1297
    %v1299 = vpack.c.bf16 %v1298, %v1298
    %v1301 = vrot.slane %v1299, 3
    %1302 = vrot.lane.b32.xlu0 %v1301, 96
    %v1303 = vpop.permute.xlu0 %1302
    %v1305 = vsel %vm148, %v1303, 0
    %1307 = vmatprep.subr.bf16.mxu0 0
    %1308 = vmatpush1.bf16.msra.mxu0 0
    %1309 = vmatprep.subr.bf16.mxu0 0
    %1310 = vmatpush1.bf16.msra.mxu0 0
    %1311 = vmatprep.subr.bf16.mxu0 0
    %1312 = vmatpush1.bf16.msra.mxu0 0
    %1313 = vmatprep.subr.bf16.mxu0 0
    %1314 = vmatpush1.bf16.msra.mxu0 0
    %1315 = vmatprep.subr.bf16.mxu0 0
    %1316 = vmatpush1.bf16.msra.mxu0 0
    %1317 = vmatprep.subr.bf16.mxu0 0
    %1318 = vmatpush1.bf16.msra.mxu0 0
    %1319 = vmatprep.subr.bf16.mxu0 0
    %1320 = vmatpush1.bf16.msra.mxu0 %v957
    %1321 = vmatprep.subr.bf16.mxu0 0
    %1322 = vmatpush1.bf16.msra.mxu0 %v956
    %1323 = vmatprep.subr.bf16.mxu0 0
    %1324 = vmatpush2.bf16.msra.mxu0 0
    %1325 = vmatprep.subr.bf16.mxu0 0
    %1326 = vmatpush2.bf16.msra.mxu0 0
    %1327 = vmatprep.subr.bf16.mxu0 0
    %1328 = vmatpush2.bf16.msra.mxu0 0
    %1329 = vmatprep.subr.bf16.mxu0 0
    %1330 = vmatpush2.bf16.msra.mxu0 0
    %1331 = vmatprep.subr.bf16.mxu0 0
    %1332 = vmatpush2.bf16.msra.mxu0 0
    %1333 = vmatprep.subr.bf16.mxu0 0
    %1334 = vmatpush2.bf16.msra.mxu0 0
    %1335 = vmatprep.subr.bf16.mxu0 0
    %1336 = vmatpush2.bf16.msra.mxu0 0
    %1337 = vmatprep.subr.bf16.mxu0 0
    %1338 = vmatpush2.bf16.msra.mxu0 0
    %1339 = vmatprep.mubr.bf16.mxu0 0
    %1340 = vmatmul.mubr.bf16.gmra.mxu0 %v1305
    %v1341 = vpop.f32.mrf.mxu0
    %v1342 = vadd.f32 0.0, %v1341
    %v1343 = vpop.f32.mrf.mxu0
    %v1344 = vpop.f32.mrf.mxu0
    %v1345 = vpop.f32.mrf.mxu0
    %1346 = vdwg.mxu0
    %v1347 = vadd.f32 %v945, %v1342
    %v1348 = vadd.f32 %v1347, %v1005
    %v1349 = vxor.u32 %v1348, 2147483648
    %v1350 = vmul.f32 %v1349, 1.442695
    %v1351 = vpow.pop %v1350
    %v1352 = vadd.f32 %v1351, 1.0
    %v1353 = vrcp.pop %v1352
    %v1354 = vmul.f32 1.0, %v1353
    %v1355 = vadd.f32 %v945, %v1020
    %v1356 = vadd.f32 %v1342, %v1029
    %1358 = vrot.lane.b32.xlu0 %v1356, 64
    %v1359 = vpop.permute.xlu0 %1358
    %v1361 = vmul.f32 %v1354, %v1359
    %1363 = vrot.lane.b32.xlu0 %v1361, 64
    %v1364 = vpop.permute.xlu0 %1363
    %v1366 = vadd.f32 %v1355, %v1364
    %v1367 = vtanh.pop %v1366
    %v1368 = vsub.f32 1.0, %v1354
    %1370 = vrot.lane.b32.xlu0 %v1367, 96
    %v1371 = vpop.permute.xlu0 %1370
    %v1373 = vmul.f32 %v1368, %v1371
    %v1375 = vrot.slane %v1298, 6
    %v1377 = vmul.f32 %v1354, %v1375
    %v1378 = vadd.f32 %v1373, %v1377
    %v1379 = vpack.c.bf16 %v1378, %v1378
    %1381 = vrot.lane.b32.xlu0 %v1379, 96
    %v1382 = vpop.permute.xlu0 %1381
    %v1384 = vsel %vm148, %v1382, 0
    %1386 = vmatprep.subr.bf16.mxu0 0
    %1387 = vmatpush1.bf16.msra.mxu0 0
    %1388 = vmatprep.subr.bf16.mxu0 0
    %1389 = vmatpush1.bf16.msra.mxu0 0
    %1390 = vmatprep.subr.bf16.mxu0 0
    %1391 = vmatpush1.bf16.msra.mxu0 0
    %1392 = vmatprep.subr.bf16.mxu0 0
    %1393 = vmatpush1.bf16.msra.mxu0 0
    %1394 = vmatprep.subr.bf16.mxu0 0
    %1395 = vmatpush1.bf16.msra.mxu0 0
    %1396 = vmatprep.subr.bf16.mxu0 0
    %1397 = vmatpush1.bf16.msra.mxu0 0
    %1398 = vmatprep.subr.bf16.mxu0 0
    %1399 = vmatpush1.bf16.msra.mxu0 %v957
    %1400 = vmatprep.subr.bf16.mxu0 0
    %1401 = vmatpush1.bf16.msra.mxu0 %v956
    %1402 = vmatprep.subr.bf16.mxu0 0
    %1403 = vmatpush2.bf16.msra.mxu0 0
    %1404 = vmatprep.subr.bf16.mxu0 0
    %1405 = vmatpush2.bf16.msra.mxu0 0
    %1406 = vmatprep.subr.bf16.mxu0 0
    %1407 = vmatpush2.bf16.msra.mxu0 0
    %1408 = vmatprep.subr.bf16.mxu0 0
    %1409 = vmatpush2.bf16.msra.mxu0 0
    %1410 = vmatprep.subr.bf16.mxu0 0
    %1411 = vmatpush2.bf16.msra.mxu0 0
    %1412 = vmatprep.subr.bf16.mxu0 0
    %1413 = vmatpush2.bf16.msra.mxu0 0
    %1414 = vmatprep.subr.bf16.mxu0 0
    %1415 = vmatpush2.bf16.msra.mxu0 0
    %1416 = vmatprep.subr.bf16.mxu0 0
    %1417 = vmatpush2.bf16.msra.mxu0 0
    %1418 = vmatprep.mubr.bf16.mxu0 0
    %1419 = vmatmul.mubr.bf16.gmra.mxu0 %v1384
    %v1420 = vpop.f32.mrf.mxu0
    %v1421 = vadd.f32 0.0, %v1420
    %v1422 = vpop.f32.mrf.mxu0
    %v1423 = vpop.f32.mrf.mxu0
    %v1424 = vpop.f32.mrf.mxu0
    %1425 = vdwg.mxu0
    %v1427 = vrot.slane %v1421, 6
    %v1429 = vadd.f32 %v945, %v1427
    %v1430 = vadd.f32 %v1429, %v1005
    %v1431 = vxor.u32 %v1430, 2147483648
    %v1432 = vmul.f32 %v1431, 1.442695
    %v1433 = vpow.pop %v1432
    %v1434 = vadd.f32 %v1433, 1.0
    %v1435 = vrcp.pop %v1434
    %v1436 = vmul.f32 1.0, %v1435
    %v1437 = vadd.f32 %v1421, %v1029
    %v1439 = vrot.slane %v1437, 6
    %1440 = vrot.lane.b32.xlu0 %v1439, 64
    %v1441 = vpop.permute.xlu0 %1440
    %v1443 = vmul.f32 %v1436, %v1441
    %1445 = vrot.lane.b32.xlu0 %v1443, 64
    %v1446 = vpop.permute.xlu0 %1445
    %v1448 = vadd.f32 %v1355, %v1446
    %v1449 = vtanh.pop %v1448
    %v1450 = vsub.f32 1.0, %v1436
    %1452 = vrot.lane.b32.xlu0 %v1449, 96
    %v1453 = vpop.permute.xlu0 %1452
    %v1455 = vmul.f32 %v1450, %v1453
    %v1457 = vrot.slane %v1378, 6
    %v1459 = vmul.f32 %v1436, %v1457
    %v1460 = vadd.f32 %v1455, %v1459
    %v1461 = vpack.c.bf16 %v1460, %v1460
    %v1463 = vrot.slane %v1461, 1
    %1464 = vrot.lane.b32.xlu0 %v1463, 96
    %v1465 = vpop.permute.xlu0 %1464
    %v1467 = vsel %vm148, %v1465, 0
    %1469 = vmatprep.subr.bf16.mxu0 0
    %1470 = vmatpush1.bf16.msra.mxu0 0
    %1471 = vmatprep.subr.bf16.mxu0 0
    %1472 = vmatpush1.bf16.msra.mxu0 0
    %1473 = vmatprep.subr.bf16.mxu0 0
    %1474 = vmatpush1.bf16.msra.mxu0 0
    %1475 = vmatprep.subr.bf16.mxu0 0
    %1476 = vmatpush1.bf16.msra.mxu0 0
    %1477 = vmatprep.subr.bf16.mxu0 0
    %1478 = vmatpush1.bf16.msra.mxu0 0
    %1479 = vmatprep.subr.bf16.mxu0 0
    %1480 = vmatpush1.bf16.msra.mxu0 0
    %1481 = vmatprep.subr.bf16.mxu0 0
    %1482 = vmatpush1.bf16.msra.mxu0 %v957
    %1483 = vmatprep.subr.bf16.mxu0 0
    %1484 = vmatpush1.bf16.msra.mxu0 %v956
    %1485 = vmatprep.subr.bf16.mxu0 0
    %1486 = vmatpush2.bf16.msra.mxu0 0
    %1487 = vmatprep.subr.bf16.mxu0 0
    %1488 = vmatpush2.bf16.msra.mxu0 0
    %1489 = vmatprep.subr.bf16.mxu0 0
    %1490 = vmatpush2.bf16.msra.mxu0 0
    %1491 = vmatprep.subr.bf16.mxu0 0
    %1492 = vmatpush2.bf16.msra.mxu0 0
    %1493 = vmatprep.subr.bf16.mxu0 0
    %1494 = vmatpush2.bf16.msra.mxu0 0
    %1495 = vmatprep.subr.bf16.mxu0 0
    %1496 = vmatpush2.bf16.msra.mxu0 0
    %1497 = vmatprep.subr.bf16.mxu0 0
    %1498 = vmatpush2.bf16.msra.mxu0 0
    %1499 = vmatprep.subr.bf16.mxu0 0
    %1500 = vmatpush2.bf16.msra.mxu0 0
    %1501 = vmatprep.mubr.bf16.mxu0 0
    %1502 = vmatmul.mubr.bf16.gmra.mxu0 %v1467
    %v1503 = vpop.f32.mrf.mxu0
    %v1504 = vadd.f32 0.0, %v1503
    %v1505 = vpop.f32.mrf.mxu0
    %v1506 = vpop.f32.mrf.mxu0
    %v1507 = vpop.f32.mrf.mxu0
    %1508 = vdwg.mxu0
    %v1510 = vrot.slane %v1504, 4
    %v1512 = vadd.f32 %v945, %v1510
    %v1513 = vadd.f32 %v1512, %v1005
    %v1514 = vxor.u32 %v1513, 2147483648
    %v1515 = vmul.f32 %v1514, 1.442695
    %v1516 = vpow.pop %v1515
    %v1517 = vadd.f32 %v1516, 1.0
    %v1518 = vrcp.pop %v1517
    %v1519 = vmul.f32 1.0, %v1518
    %v1520 = vadd.f32 %v1504, %v1029
    %v1522 = vrot.slane %v1520, 4
    %1523 = vrot.lane.b32.xlu0 %v1522, 64
    %v1524 = vpop.permute.xlu0 %1523
    %v1526 = vmul.f32 %v1519, %v1524
    %1528 = vrot.lane.b32.xlu0 %v1526, 64
    %v1529 = vpop.permute.xlu0 %1528
    %v1531 = vadd.f32 %v1355, %v1529
    %v1532 = vtanh.pop %v1531
    %v1533 = vsub.f32 1.0, %v1519
    %1535 = vrot.lane.b32.xlu0 %v1532, 96
    %v1536 = vpop.permute.xlu0 %1535
    %v1538 = vmul.f32 %v1533, %v1536
    %v1540 = vrot.slane %v1460, 6
    %v1542 = vmul.f32 %v1519, %v1540
    %v1543 = vadd.f32 %v1538, %v1542
    %v1544 = vpack.c.bf16 %v1543, %v1543
    %v1546 = vrot.slane %v1544, 2
    %1547 = vrot.lane.b32.xlu0 %v1546, 96
    %v1548 = vpop.permute.xlu0 %1547
    %v1550 = vsel %vm148, %v1548, 0
    %1552 = vmatprep.subr.bf16.mxu0 0
    %1553 = vmatpush1.bf16.msra.mxu0 0
    %1554 = vmatprep.subr.bf16.mxu0 0
    %1555 = vmatpush1.bf16.msra.mxu0 0
    %1556 = vmatprep.subr.bf16.mxu0 0
    %1557 = vmatpush1.bf16.msra.mxu0 0
    %1558 = vmatprep.subr.bf16.mxu0 0
    %1559 = vmatpush1.bf16.msra.mxu0 0
    %1560 = vmatprep.subr.bf16.mxu0 0
    %1561 = vmatpush1.bf16.msra.mxu0 0
    %1562 = vmatprep.subr.bf16.mxu0 0
    %1563 = vmatpush1.bf16.msra.mxu0 0
    %1564 = vmatprep.subr.bf16.mxu0 0
    %1565 = vmatpush1.bf16.msra.mxu0 %v957
    %1566 = vmatprep.subr.bf16.mxu0 0
    %1567 = vmatpush1.bf16.msra.mxu0 %v956
    %1568 = vmatprep.subr.bf16.mxu0 0
    %1569 = vmatpush2.bf16.msra.mxu0 0
    %1570 = vmatprep.subr.bf16.mxu0 0
    %1571 = vmatpush2.bf16.msra.mxu0 0
    %1572 = vmatprep.subr.bf16.mxu0 0
    %1573 = vmatpush2.bf16.msra.mxu0 0
    %1574 = vmatprep.subr.bf16.mxu0 0
    %1575 = vmatpush2.bf16.msra.mxu0 0
    %1576 = vmatprep.subr.bf16.mxu0 0
    %1577 = vmatpush2.bf16.msra.mxu0 0
    %1578 = vmatprep.subr.bf16.mxu0 0
    %1579 = vmatpush2.bf16.msra.mxu0 0
    %1580 = vmatprep.subr.bf16.mxu0 0
    %1581 = vmatpush2.bf16.msra.mxu0 0
    %1582 = vmatprep.subr.bf16.mxu0 0
    %1583 = vmatpush2.bf16.msra.mxu0 0
    %1584 = vmatprep.mubr.bf16.mxu0 0
    %1585 = vmatmul.mubr.bf16.gmra.mxu0 %v1550
    %v1586 = vpop.f32.mrf.mxu0
    %v1587 = vadd.f32 0.0, %v1586
    %v1588 = vpop.f32.mrf.mxu0
    %v1589 = vpop.f32.mrf.mxu0
    %v1590 = vpop.f32.mrf.mxu0
    %1591 = vdwg.mxu0
    %v1593 = vrot.slane %v1587, 2
    %v1595 = vadd.f32 %v945, %v1593
    %v1596 = vadd.f32 %v1595, %v1005
    %v1597 = vxor.u32 %v1596, 2147483648
    %v1598 = vmul.f32 %v1597, 1.442695
    %v1599 = vpow.pop %v1598
    %v1600 = vadd.f32 %v1599, 1.0
    %v1601 = vrcp.pop %v1600
    %v1602 = vmul.f32 1.0, %v1601
    %v1603 = vadd.f32 %v1587, %v1029
    %v1605 = vrot.slane %v1603, 2
    %1606 = vrot.lane.b32.xlu0 %v1605, 64
    %v1607 = vpop.permute.xlu0 %1606
    %v1609 = vmul.f32 %v1602, %v1607
    %1611 = vrot.lane.b32.xlu0 %v1609, 64
    %v1612 = vpop.permute.xlu0 %1611
    %v1614 = vadd.f32 %v1355, %v1612
    %v1615 = vtanh.pop %v1614
    %v1616 = vsub.f32 1.0, %v1602
    %1618 = vrot.lane.b32.xlu0 %v1615, 96
    %v1619 = vpop.permute.xlu0 %1618
    %v1621 = vmul.f32 %v1616, %v1619
    %v1623 = vrot.slane %v1543, 6
    %v1625 = vmul.f32 %v1602, %v1623
    %v1626 = vadd.f32 %v1621, %v1625
    %v1627 = vrot.slane %v1132, 2
    %v1628 = vrot.slane %v1215, 4
    %v1629 = vrot.slane %v1460, 2
    %v1630 = vrot.slane %v1543, 4
    %v1632 = vrot.slane %v1626, 6
    %1633 = vrot.lane.b32.xlu0 %v1050, 96
    %v1634 = vpop.permute.xlu0 %1633
    %1635 = vrot.lane.b32.xlu0 %v1627, 96
    %v1636 = vpop.permute.xlu0 %1635
    %1637 = vrot.lane.b32.xlu0 %v1628, 96
    %v1638 = vpop.permute.xlu0 %1637
    %1639 = vrot.lane.b32.xlu0 %v1375, 96
    %v1640 = vpop.permute.xlu0 %1639
    %1641 = vrot.lane.b32.xlu0 %v1378, 96
    %v1642 = vpop.permute.xlu0 %1641
    %1643 = vrot.lane.b32.xlu0 %v1629, 96
    %v1644 = vpop.permute.xlu0 %1643
    %1645 = vrot.lane.b32.xlu0 %v1630, 96
    %v1646 = vpop.permute.xlu0 %1645
    %1647 = vrot.lane.b32.xlu0 %v1632, 96
    %v1648 = vpop.permute.xlu0 %1647
    %vm1657 = vcmask 254976
    %1658 = vst.msk [vmem:[#allocation11] sm:$0x3] %vm1657, %v1634
    %1659 = vst.msk [vmem:[#allocation11 + $0x2] sm:$0x3] %vm1657, %v1636
    %1660 = vst.msk [vmem:[#allocation11 + $0x4] sm:$0x3] %vm1657, %v1638
    %1661 = vst.msk [vmem:[#allocation11 + $0x6] sm:$0x3] %vm1657, %v1640
    %1662 = vst.msk [vmem:[#allocation11 + $0x8] sm:$0x3] %vm1657, %v1642
    %1663 = vst.msk [vmem:[#allocation11 + $0xa] sm:$0x3] %vm1657, %v1644
    %1664 = vst.msk [vmem:[#allocation11 + $0xc] sm:$0x3] %vm1657, %v1646
    %1665 = vst.msk [vmem:[#allocation11 + $0xe] sm:$0x3] %vm1657, %v1648
    %1667 = vrot.lane.b32.xlu0 %v874, 96
    %v1668 = vpop.permute.xlu0 %1667
    %1669 = vrot.lane.b32.xlu0 %v1626, 96
    %v1670 = vpop.permute.xlu0 %1669
    %vm1673 = vcmask 261126
    %1674 = vst.msk [vmem:[#allocation12 - $0x6] sm:$0xc0] %vm1673, %v1668
    %1675 = vst.msk [vmem:[#allocation12 - $0x4] sm:$0xc0] %vm1673, %v1670
    // Predicated region
    $region66: #{tpu_custom_call.1} parent=1 // pred_check
      _
    $region67: #{tpu_custom_call.1} parent=1 // pred_check_branch
      %1677 = sbr.rel (0) target = $region69
    $region68: #{tpu_custom_call.1} parent=1 // pred_region
      %s1679 = ssub.s32 256, 256
      %1680 = vsyncadd [#allocation4], %s1679
      %s1681 = sshll.u32 [#allocation11], 4
      %s1682 = int_to_ptr.vmem [resolvable:$true] %s1681
      %1687 = dma.vmem_to_hbm [thread:$0]  %s1682, 256, %s11, [#allocation4], 32, 32, 2
    $region69: #{tpu_custom_call.1} parent=1 // pred_fallthru
      _
    // Predicated region
    $region70: #{tpu_custom_call.1} parent=1 // pred_check
      _
    $region71: #{tpu_custom_call.1} parent=1 // pred_check_branch
      %1689 = sbr.rel (0) target = $region73
    $region72: #{tpu_custom_call.1} parent=1 // pred_region
      %s1691 = ssub.s32 64, 64
      %1692 = vsyncadd [#allocation13], %s1691
      %s1693 = sshll.u32 [#allocation12], 4
      %s1694 = int_to_ptr.vmem [resolvable:$true] %s1693
      %1699 = dma.vmem_to_hbm [thread:$0]  %s1694, 64, %s12, [#allocation13], 32, 32, 2
    $region73: #{tpu_custom_call.1} parent=1 // pred_fallthru
      _
    // Predicated region
    $region74: #{tpu_custom_call.1} parent=1 // pred_check
      _
    $region75: #{tpu_custom_call.1} parent=1 // pred_check_branch
      %1701 = sbr.rel (0) target = $region77
    $region76: #{tpu_custom_call.1} parent=1 // pred_region
      %1702 = dma.done [#allocation4], 256
    $region77: #{tpu_custom_call.1} parent=1 // pred_fallthru
      _
    // Predicated region
    $region78: #{tpu_custom_call.1} parent=1 // pred_check
      _
    $region79: #{tpu_custom_call.1} parent=1 // pred_check_branch
      %1704 = sbr.rel (0) target = $region81
    $region80: #{tpu_custom_call.1} parent=1 // pred_region
      %1705 = dma.done [#allocation13], 64
    $region81: #{tpu_custom_call.1} parent=1 // pred_fallthru
      _
    %1706 = vsyncpa [#allocation3], 1
    %1707 = vsyncpa [#allocation6], 1
    %1708 = vsyncpa [#allocation9], 1
    %1709 = vsyncpa [#allocation4], 1
    %1710 = vsyncpa [#allocation13], 1

</llo_original>
